<compile_context>
chip_gen: v7x
topology: tpu7x:2x2x1
jax: 0.10.0
libtpu: 0.0.40
codegen_flags: <defaults>
</compile_context>

<pallas_src>
import jax
import jax.numpy as jnp
from jax.experimental import pallas as pl
from jax.experimental.pallas import tpu as pltpu


def _softplus(x):
    # numerically stable softplus; identical to jax.nn.softplus (= logaddexp(x, 0)).
    return jnp.logaddexp(x, 0.0)


def vae_neg_elbo_kernel(
    x_ref, eps_ref,          # (TB, D) bf16, (TB, Mp) f32
    w1_ref, b1_ref,          # encoder hidden layer              (D, He)    bf16, (1, He)    f32
    w2_ref, b2_ref,          # fused+padded mean|log_std head    (He, 2*Mp) bf16, (1, 2*Mp)  f32
    w3_ref, b3_ref,          # decoder hidden layer (padded rows)(Mp, Hd)   bf16, (1, Hd)    f32
    w4_ref, b4_ref,          # decoder logits head               (Hd, D)    bf16, (1, D)     f32
    out_ref,                 # (1, 8, 128) per-tile partial sum of (log p(x|z) - KL)
):
    x_bf = x_ref[...]                          # bf16; binarized {0,1} so exact
    x = x_bf.astype(jnp.float32)               # f32 copy for the likelihood term
    eps = eps_ref[...]                         # (TB, Mp) f32, zero in padded lanes
    Mp = eps.shape[-1]

    # ---- encoder MLP -> q(z|x) = N(mu, diag(std^2)) ----
    h = jnp.dot(x_bf, w1_ref[...], preferred_element_type=jnp.float32) + b1_ref[...]
    h = jnp.maximum(h, 0.0)                                     # ReLU, f32

    # Fused heads: one (He, 2*Mp) matmul; mu / log_std are full 128-lane groups.
    stats = jnp.dot(h.astype(jnp.bfloat16), w2_ref[...],
                    preferred_element_type=jnp.float32) + b2_ref[...]   # (TB, 2*Mp)
    mu = stats[:, :Mp]
    log_std = stats[:, Mp:]
    # TODO(synk): like the PyTorch module, log_std feeds exp() with no clamp;
    # extreme parameters overflow exactly as they would in torch.
    std = jnp.exp(log_std)

    # ---- reparameterized sample (padded lanes: mu=0, std=1, eps=0 -> z=0) ----
    z = mu + std * eps                                          # (TB, Mp) f32

    # ---- decoder MLP -> Bernoulli logits over pixels ----
    hd = jnp.dot(z.astype(jnp.bfloat16), w3_ref[...],
                 preferred_element_type=jnp.float32) + b3_ref[...]
    hd = jnp.maximum(hd, 0.0)
    logits = jnp.dot(hd.astype(jnp.bfloat16), w4_ref[...],
                     preferred_element_type=jnp.float32) + b4_ref[...]  # (TB, D)

    # ---- Bernoulli log-likelihood, summed over pixels ----
    # Bernoulli(logits=l).log_prob(x) = x*l - softplus(l)
    log_px_z = jnp.sum(x * logits - _softplus(logits), axis=-1, keepdims=True)  # (TB,1)

    # ---- analytic KL( N(mu, std) || N(0, 1) ); padded lanes contribute exactly 0 ----
    kl = jnp.sum(0.5 * (std * std + mu * mu - 1.0) - log_std, axis=-1, keepdims=True)

    # ---- per-tile partial sum of the ELBO terms (final reduction in plain JAX) ----
    partial = jnp.sum(log_px_z - kl)                            # scalar
    # Lane-dense unmasked store: splat the scalar across the (1, 8, 128) block.
    out_ref[...] = jnp.full(out_ref.shape, partial, dtype=jnp.float32)


def _num_tensorcores():
    """2 on dual-TensorCore chips (v7x, v5p megacore); 1 on v5e/v6e."""
    try:
        kind = (jax.devices()[0].device_kind or "").lower()
    except Exception:
        return 1
    if "v7" in kind or "v5p" in kind:
        return 2
    return 1


def _pick_batch_tile(B, row_bytes, n_cores):
    """Largest batch tile such that:
       * grid length is a multiple of the TensorCore count (v7x uses both TCs),
       * a split tile keeps 16-row alignment (bf16 sublane packing),
       * the activation tile stays well under the VMEM scoped budget."""
    tb = B
    if n_cores > 1 and B % (16 * n_cores) == 0:
        tb = B // n_cores
    budget = 8 << 20   # conservative per-tile activation budget (v7x has only 64 MiB VMEM)
    while tb * row_bytes > budget and tb % 32 == 0:
        tb //= 2
    return tb


def vae_forward(x_img, eps, params, tb=None):
    """x_img: (B, H, W) float in {0,1}; eps: (B, M) reparameterization noise."""
    B, H, W = x_img.shape
    D = H * W
    M = eps.shape[-1]
    Mp = ((M + 127) // 128) * 128
    Mp = max(Mp, 128)                       # full 128-lane groups for the latent path
    pad_m = Mp - M

    # x is binarized {0,1}: bf16 is exact and halves the dominant HBM stream.
    x = x_img.reshape(B, D).astype(jnp.bfloat16)
    eps_p = jnp.pad(eps.astype(jnp.float32), ((0, 0), (0, pad_m)))

    # Weights cast to bf16 once on the host (native MXU dtype, half the DMA);
    # biases stay f32. Encoder heads fused and zero-padded to lane boundaries.
    w1 = params["w1"].astype(jnp.bfloat16)
    b1 = params["b1"].astype(jnp.float32)
    w2 = jnp.concatenate(
        [jnp.pad(params["w2m"], ((0, 0), (0, pad_m))),
         jnp.pad(params["w2s"], ((0, 0), (0, pad_m)))], axis=1).astype(jnp.bfloat16)
    b2 = jnp.concatenate(
        [jnp.pad(params["b2m"], ((0, 0), (0, pad_m))),
         jnp.pad(params["b2s"], ((0, 0), (0, pad_m)))], axis=1).astype(jnp.float32)
    w3 = jnp.pad(params["w3"], ((0, pad_m), (0, 0))).astype(jnp.bfloat16)
    b3 = params["b3"].astype(jnp.float32)
    w4 = params["w4"].astype(jnp.bfloat16)
    b4 = params["b4"].astype(jnp.float32)

    He = w1.shape[1]
    Hd = w3.shape[1]

    n_cores = _num_tensorcores()
    row_bytes = 2 * D + 4 * Mp              # x bf16 + eps f32 per batch row
    tb = _pick_batch_tile(B, row_bytes, n_cores) if tb is None else tb
    assert B % tb == 0, f"batch {B} must be divisible by tile {tb}"
    G = B // tb

    weights = (w1, b1, w2, b2, w3, b3, w4, b4)
    operands = (x, eps_p) + weights

    flops = 2 * B * (D * He + He * (2 * Mp) + Mp * Hd + Hd * D)
    transcendentals = B * (2 * D + Mp)       # softplus = exp+log per pixel; exp per latent
    bytes_accessed = (
        x.size * 2 + eps_p.size * 4
        + sum(int(a.size) * a.dtype.itemsize for a in weights)
        + G * 8 * 128 * 4
    )

    def make_call(single_buffer_weights):
        def resident_spec(arr):
            idx_map = lambda i: (0,) * arr.ndim   # constant -> DMA'd once, VMEM-resident
            if single_buffer_weights:
                return pl.BlockSpec(arr.shape, idx_map, pipeline_mode=pl.Buffered(1))
            return pl.BlockSpec(arr.shape, idx_map)

        in_specs = [
            pl.BlockSpec((tb, D), lambda i: (i, 0)),       # x: tiled over batch
            pl.BlockSpec((tb, Mp), lambda i: (i, 0)),      # eps: tiled over batch
        ] + [resident_spec(a) for a in weights]

        return pl.pallas_call(
            vae_neg_elbo_kernel,
            out_shape=jax.ShapeDtypeStruct((G, 8, 128), jnp.float32),
            grid=(G,),
            in_specs=in_specs,
            out_specs=pl.BlockSpec((1, 8, 128), lambda i: (i, 0, 0)),
            compiler_params=pltpu.CompilerParams(
                dimension_semantics=("parallel",)),
            cost_estimate=pl.CostEstimate(
                flops=flops,
                transcendentals=transcendentals,
                bytes_accessed=bytes_accessed),
        )

    try:
        # Single-buffer the never-changing weights (they are never re-DMA'd);
        # frees VMEM headroom, important on v7x's 64 MiB pool as widths grow.
        partials = make_call(single_buffer_weights=True)(*operands)
    except Exception:
        # Fallback for jaxlib versions that reject pipeline_mode on pallas_call specs.
        partials = make_call(single_buffer_weights=False)(*operands)

    # Tiny final reduction in JAX: sum per-tile partials, average over batch, negate.
    return -jnp.sum(partials[:, 0, 0]) / B


def init_params(key, D, He, M, Hd):
    """Deterministic small-scale init (stand-in for torch's default init)."""
    ks = jax.random.split(key, 5)
    s = 0.05

    def lin(k, fan_in, fan_out):
        kw, kb = jax.random.split(k)
        w = s * jax.random.normal(kw, (fan_in, fan_out), jnp.float32)
        b = s * jax.random.normal(kb, (1, fan_out), jnp.float32)
        return w, b

    w1, b1 = lin(ks[0], D, He)
    w2m, b2m = lin(ks[1], He, M)
    w2s, b2s = lin(ks[2], He, M)
    w3, b3 = lin(ks[3], M, Hd)
    w4, b4 = lin(ks[4], Hd, D)
    return dict(w1=w1, b1=b1, w2m=w2m, b2m=b2m, w2s=w2s, b2s=b2s,
                w3=w3, b3=b3, w4=w4, b4=b4)


def reference_forward(x_img, eps, p, bf16_matmul=True):
    """Pure-JAX reference. With bf16_matmul=True it mirrors the kernel's
    bf16-input / f32-accumulate matmuls; with False it is full f32."""
    B, H, W = x_img.shape
    x = x_img.reshape(B, H * W)

    def mm(a, w):
        if bf16_matmul:
            return jnp.dot(a.astype(jnp.bfloat16), w.astype(jnp.bfloat16),
                           preferred_element_type=jnp.float32)
        return jnp.dot(a, w)

    h = jax.nn.relu(mm(x, p["w1"]) + p["b1"])
    mu = mm(h, p["w2m"]) + p["b2m"]
    log_std = mm(h, p["w2s"]) + p["b2s"]
    std = jnp.exp(log_std)
    z = mu + std * eps
    hd = jax.nn.relu(mm(z, p["w3"]) + p["b3"])
    logits = mm(hd, p["w4"]) + p["b4"]
    log_px_z = jnp.sum(x * logits - jax.nn.softplus(logits), axis=-1)
    kl = jnp.sum(0.5 * (std**2 + mu**2 - 1.0) - log_std, axis=-1)
    return -jnp.mean(log_px_z - kl)


if __name__ == "__main__":
    # Small shapes consistent with the module's forward: x is (B, H, W).
    B, Himg, Wimg = 32, 16, 16
    D = Himg * Wimg          # 256 flattened pixels
    He = 128                 # encoder hidden width
    Hd = 128                 # decoder hidden width
    M = 16                   # latent dimension (padded to 128 lanes inside the wrapper)

    key = jax.random.PRNGKey(0)
    k_x, k_eps, k_p = jax.random.split(key, 3)

    # Binarized image data in {0, 1} (Bernoulli likelihood target).
    x_img = (jax.random.uniform(k_x, (B, Himg, Wimg), jnp.float32) > 0.5).astype(jnp.float32)
    # TODO(synk): torch's internal rsample() RNG has no Pallas equivalent; the
    # reparameterization noise eps is passed in explicitly instead.
    eps = jax.random.normal(k_eps, (B, M), jnp.float32)

    params = init_params(k_p, D, He, M, Hd)

    neg_elbo = jax.block_until_ready(vae_forward(x_img, eps, params))

    # Tight check against a reference that uses the same bf16-input matmuls.
    ref_bf16 = reference_forward(x_img, eps, params, bf16_matmul=True)
    assert jnp.allclose(neg_elbo, ref_bf16, rtol=1e-3, atol=1e-3), (neg_elbo, ref_bf16)

    # Looser check against the full-f32 reference (bf16 matmul inputs only).
    ref_f32 = reference_forward(x_img, eps, params, bf16_matmul=False)
    assert jnp.allclose(neg_elbo, ref_f32, rtol=3e-2, atol=3e-2), (neg_elbo, ref_f32)

    print("KERNEL_OK")
</pallas_src>

<mosaic_0001>
module attributes {stable_mosaic.version = 11 : i64} {
  func.func @vae_neg_elbo_kernel(%arg0: i32, %arg1: memref<32x256xbf16, #tpu.memory_space<vmem>>, %arg2: memref<32x128xf32, #tpu.memory_space<vmem>>, %arg3: memref<256x128xbf16, #tpu.memory_space<vmem>>, %arg4: memref<1x128xf32, #tpu.memory_space<vmem>>, %arg5: memref<128x256xbf16, #tpu.memory_space<vmem>>, %arg6: memref<1x256xf32, #tpu.memory_space<vmem>>, %arg7: memref<128x128xbf16, #tpu.memory_space<vmem>>, %arg8: memref<1x128xf32, #tpu.memory_space<vmem>>, %arg9: memref<128x256xbf16, #tpu.memory_space<vmem>>, %arg10: memref<1x256xf32, #tpu.memory_space<vmem>>, %arg11: memref<1x8x128xf32, #tpu.memory_space<vmem>>) attributes {dimension_semantics = [#tpu.dimension_semantics<parallel>], iteration_bounds = array<i64: 1>, scalar_prefetch = 0 : i64, scratch_operands = 0 : i64, tpu.core_type = #tpu.core_type<tc>, window_params = [{transform_indices = @transform_0, window_bounds = array<i64: 32, 256>}, {transform_indices = @transform_1, window_bounds = array<i64: 32, 128>}, {pipeline_mode = #tpu.pipeline_mode<synchronous>, transform_indices = @transform_2, window_bounds = array<i64: 256, 128>}, {pipeline_mode = #tpu.pipeline_mode<synchronous>, transform_indices = @transform_3, window_bounds = array<i64: 1, 128>}, {pipeline_mode = #tpu.pipeline_mode<synchronous>, transform_indices = @transform_4, window_bounds = array<i64: 128, 256>}, {pipeline_mode = #tpu.pipeline_mode<synchronous>, transform_indices = @transform_5, window_bounds = array<i64: 1, 256>}, {pipeline_mode = #tpu.pipeline_mode<synchronous>, transform_indices = @transform_6, window_bounds = array<i64: 128, 128>}, {pipeline_mode = #tpu.pipeline_mode<synchronous>, transform_indices = @transform_7, window_bounds = array<i64: 1, 128>}, {pipeline_mode = #tpu.pipeline_mode<synchronous>, transform_indices = @transform_8, window_bounds = array<i64: 128, 256>}, {pipeline_mode = #tpu.pipeline_mode<synchronous>, transform_indices = @transform_9, window_bounds = array<i64: 1, 256>}, {transform_indices = @transform_10, window_bounds = array<i64: 1, 8, 128>}]} {
    %c0 = arith.constant 0 : index
    %c0_0 = arith.constant 0 : index
    %0 = vector.load %arg1[%c0, %c0_0] : memref<32x256xbf16, #tpu.memory_space<vmem>>, vector<32x256xbf16>
    %1 = arith.extf %0 : vector<32x256xbf16> to vector<32x256xf32>
    %c0_1 = arith.constant 0 : index
    %c0_2 = arith.constant 0 : index
    %2 = vector.load %arg2[%c0_1, %c0_2] : memref<32x128xf32, #tpu.memory_space<vmem>>, vector<32x128xf32>
    %c0_3 = arith.constant 0 : index
    %c0_4 = arith.constant 0 : index
    %3 = vector.load %arg3[%c0_3, %c0_4] : memref<256x128xbf16, #tpu.memory_space<vmem>>, vector<256x128xbf16>
    %cst = arith.constant dense<0.000000e+00> : vector<32x128xf32>
    %4 = tpu.matmul %0, %3, %cst {dimension_numbers = #tpu.dot_dimension_numbers<[1], [0], [0], [1], [0, 0, 1, 1], [], []>} : vector<32x256xbf16>, vector<256x128xbf16>, vector<32x128xf32> -> vector<32x128xf32>
    %c0_5 = arith.constant 0 : index
    %c0_6 = arith.constant 0 : index
    %5 = vector.load %arg4[%c0_5, %c0_6] : memref<1x128xf32, #tpu.memory_space<vmem>>, vector<1x128xf32>
    %6 = vector.broadcast %5 : vector<1x128xf32> to vector<32x128xf32>
    %7 = arith.addf %4, %6 : vector<32x128xf32>
    %cst_7 = arith.constant 0.000000e+00 : f32
    %8 = vector.broadcast %cst_7 : f32 to vector<32x128xf32>
    %9 = arith.maximumf %7, %8 : vector<32x128xf32>
    %10 = arith.truncf %9 : vector<32x128xf32> to vector<32x128xbf16>
    %c0_8 = arith.constant 0 : index
    %c0_9 = arith.constant 0 : index
    %11 = vector.load %arg5[%c0_8, %c0_9] : memref<128x256xbf16, #tpu.memory_space<vmem>>, vector<128x256xbf16>
    %cst_10 = arith.constant dense<0.000000e+00> : vector<32x256xf32>
    %12 = tpu.matmul %10, %11, %cst_10 {dimension_numbers = #tpu.dot_dimension_numbers<[1], [0], [0], [1], [0, 0, 1, 1], [], []>} : vector<32x128xbf16>, vector<128x256xbf16>, vector<32x256xf32> -> vector<32x256xf32>
    %c0_11 = arith.constant 0 : index
    %c0_12 = arith.constant 0 : index
    %13 = vector.load %arg6[%c0_11, %c0_12] : memref<1x256xf32, #tpu.memory_space<vmem>>, vector<1x256xf32>
    %14 = vector.broadcast %13 : vector<1x256xf32> to vector<32x256xf32>
    %15 = arith.addf %12, %14 : vector<32x256xf32>
    %16 = vector.extract_strided_slice %15 {offsets = [0, 0], sizes = [32, 128], strides = [1, 1]} : vector<32x256xf32> to vector<32x128xf32>
    %17 = vector.extract_strided_slice %15 {offsets = [0, 128], sizes = [32, 128], strides = [1, 1]} : vector<32x256xf32> to vector<32x128xf32>
    %18 = math.exp %17 : vector<32x128xf32>
    %19 = arith.mulf %18, %2 : vector<32x128xf32>
    %20 = arith.addf %16, %19 : vector<32x128xf32>
    %21 = arith.truncf %20 : vector<32x128xf32> to vector<32x128xbf16>
    %c0_13 = arith.constant 0 : index
    %c0_14 = arith.constant 0 : index
    %22 = vector.load %arg7[%c0_13, %c0_14] : memref<128x128xbf16, #tpu.memory_space<vmem>>, vector<128x128xbf16>
    %cst_15 = arith.constant dense<0.000000e+00> : vector<32x128xf32>
    %23 = tpu.matmul %21, %22, %cst_15 {dimension_numbers = #tpu.dot_dimension_numbers<[1], [0], [0], [1], [0, 0, 1, 1], [], []>} : vector<32x128xbf16>, vector<128x128xbf16>, vector<32x128xf32> -> vector<32x128xf32>
    %c0_16 = arith.constant 0 : index
    %c0_17 = arith.constant 0 : index
    %24 = vector.load %arg8[%c0_16, %c0_17] : memref<1x128xf32, #tpu.memory_space<vmem>>, vector<1x128xf32>
    %25 = vector.broadcast %24 : vector<1x128xf32> to vector<32x128xf32>
    %26 = arith.addf %23, %25 : vector<32x128xf32>
    %cst_18 = arith.constant 0.000000e+00 : f32
    %27 = vector.broadcast %cst_18 : f32 to vector<32x128xf32>
    %28 = arith.maximumf %26, %27 : vector<32x128xf32>
    %29 = arith.truncf %28 : vector<32x128xf32> to vector<32x128xbf16>
    %c0_19 = arith.constant 0 : index
    %c0_20 = arith.constant 0 : index
    %30 = vector.load %arg9[%c0_19, %c0_20] : memref<128x256xbf16, #tpu.memory_space<vmem>>, vector<128x256xbf16>
    %cst_21 = arith.constant dense<0.000000e+00> : vector<32x256xf32>
    %31 = tpu.matmul %29, %30, %cst_21 {dimension_numbers = #tpu.dot_dimension_numbers<[1], [0], [0], [1], [0, 0, 1, 1], [], []>} : vector<32x128xbf16>, vector<128x256xbf16>, vector<32x256xf32> -> vector<32x256xf32>
    %c0_22 = arith.constant 0 : index
    %c0_23 = arith.constant 0 : index
    %32 = vector.load %arg10[%c0_22, %c0_23] : memref<1x256xf32, #tpu.memory_space<vmem>>, vector<1x256xf32>
    %33 = vector.broadcast %32 : vector<1x256xf32> to vector<32x256xf32>
    %34 = arith.addf %31, %33 : vector<32x256xf32>
    %35 = arith.mulf %1, %34 : vector<32x256xf32>
    %cst_24 = arith.constant 0.000000e+00 : f32
    %36 = vector.broadcast %cst_24 : f32 to vector<32x256xf32>
    %37 = arith.maximumf %34, %36 : vector<32x256xf32>
    %38 = vector.broadcast %cst_24 : f32 to vector<32x256xf32>
    %39 = arith.subf %34, %38 : vector<32x256xf32>
    %40 = arith.cmpf one, %39, %39 : vector<32x256xf32>
    %41 = vector.broadcast %cst_24 : f32 to vector<32x256xf32>
    %42 = arith.addf %34, %41 : vector<32x256xf32>
    %43 = math.absf %39 : vector<32x256xf32>
    %cst_25 = arith.constant 0.000000e+00 : f32
    %44 = vector.broadcast %cst_25 : f32 to vector<32x256xf32>
    %45 = arith.subf %44, %43 : vector<32x256xf32>
    %46 = math.exp %45 : vector<32x256xf32>
    %47 = math.log1p %46 : vector<32x256xf32>
    %48 = arith.addf %37, %47 : vector<32x256xf32>
    %49 = arith.select %40, %42, %48 : vector<32x256xi1>, vector<32x256xf32>
    %50 = arith.subf %35, %49 : vector<32x256xf32>
    %cst_26 = arith.constant dense<0.000000e+00> : vector<32xf32>
    %51 = vector.multi_reduction <add>, %50, %cst_26 [1] : vector<32x256xf32> to vector<32xf32>
    %52 = vector.shape_cast %51 : vector<32xf32> to vector<32x1xf32>
    %53 = arith.mulf %18, %18 : vector<32x128xf32>
    %54 = arith.mulf %16, %16 : vector<32x128xf32>
    %55 = arith.addf %53, %54 : vector<32x128xf32>
    %cst_27 = arith.constant 1.000000e+00 : f32
    %56 = vector.broadcast %cst_27 : f32 to vector<32x128xf32>
    %57 = arith.subf %55, %56 : vector<32x128xf32>
    %cst_28 = arith.constant 5.000000e-01 : f32
    %58 = vector.broadcast %cst_28 : f32 to vector<32x128xf32>
    %59 = arith.mulf %58, %57 : vector<32x128xf32>
    %60 = arith.subf %59, %17 : vector<32x128xf32>
    %cst_29 = arith.constant dense<0.000000e+00> : vector<32xf32>
    %61 = vector.multi_reduction <add>, %60, %cst_29 [1] : vector<32x128xf32> to vector<32xf32>
    %62 = vector.shape_cast %61 : vector<32xf32> to vector<32x1xf32>
    %63 = arith.subf %52, %62 : vector<32x1xf32>
    %64 = vector.shape_cast %63 : vector<32x1xf32> to vector<1x32x1xf32>
    %cst_30 = arith.constant dense<0.000000e+00> : vector<1xf32>
    %65 = vector.multi_reduction <add>, %64, %cst_30 [1, 2] : vector<1x32x1xf32> to vector<1xf32>
    %66 = vector.shape_cast %65 : vector<1xf32> to vector<1x1x1xf32>
    %67 = vector.extract %66[0, 0, 0] : f32 from vector<1x1x1xf32>
    %68 = vector.broadcast %67 : f32 to vector<1x8x128xf32>
    %c0_31 = arith.constant 0 : index
    %c0_32 = arith.constant 0 : index
    %c0_33 = arith.constant 0 : index
    %69 = vector.load %arg11[%c0_31, %c0_32, %c0_33] : memref<1x8x128xf32, #tpu.memory_space<vmem>>, vector<1x8x128xf32>
    tpu.vector_store %arg11[%c0_31, %c0_32, %c0_33], %68 {strides = array<i32>} : memref<1x8x128xf32, #tpu.memory_space<vmem>>, vector<1x8x128xf32>,
    return
  }
  func.func @transform_0(%arg0: i32) -> (i32, i32) {
    %c0_i32 = arith.constant 0 : i32
    %c0_i32_0 = arith.constant 0 : i32
    return %arg0, %c0_i32 : i32, i32
  }
  func.func @transform_1(%arg0: i32) -> (i32, i32) {
    %c0_i32 = arith.constant 0 : i32
    %c0_i32_0 = arith.constant 0 : i32
    return %arg0, %c0_i32 : i32, i32
  }
  func.func @transform_2(%arg0: i32) -> (i32, i32) {
    %c0_i32 = arith.constant 0 : i32
    %c0_i32_0 = arith.constant 0 : i32
    %c0_i32_1 = arith.constant 0 : i32
    return %c0_i32, %c0_i32_0 : i32, i32
  }
  func.func @transform_3(%arg0: i32) -> (i32, i32) {
    %c0_i32 = arith.constant 0 : i32
    %c0_i32_0 = arith.constant 0 : i32
    %c0_i32_1 = arith.constant 0 : i32
    return %c0_i32, %c0_i32_0 : i32, i32
  }
  func.func @transform_4(%arg0: i32) -> (i32, i32) {
    %c0_i32 = arith.constant 0 : i32
    %c0_i32_0 = arith.constant 0 : i32
    %c0_i32_1 = arith.constant 0 : i32
    return %c0_i32, %c0_i32_0 : i32, i32
  }
  func.func @transform_5(%arg0: i32) -> (i32, i32) {
    %c0_i32 = arith.constant 0 : i32
    %c0_i32_0 = arith.constant 0 : i32
    %c0_i32_1 = arith.constant 0 : i32
    return %c0_i32, %c0_i32_0 : i32, i32
  }
  func.func @transform_6(%arg0: i32) -> (i32, i32) {
    %c0_i32 = arith.constant 0 : i32
    %c0_i32_0 = arith.constant 0 : i32
    %c0_i32_1 = arith.constant 0 : i32
    return %c0_i32, %c0_i32_0 : i32, i32
  }
  func.func @transform_7(%arg0: i32) -> (i32, i32) {
    %c0_i32 = arith.constant 0 : i32
    %c0_i32_0 = arith.constant 0 : i32
    %c0_i32_1 = arith.constant 0 : i32
    return %c0_i32, %c0_i32_0 : i32, i32
  }
  func.func @transform_8(%arg0: i32) -> (i32, i32) {
    %c0_i32 = arith.constant 0 : i32
    %c0_i32_0 = arith.constant 0 : i32
    %c0_i32_1 = arith.constant 0 : i32
    return %c0_i32, %c0_i32_0 : i32, i32
  }
  func.func @transform_9(%arg0: i32) -> (i32, i32) {
    %c0_i32 = arith.constant 0 : i32
    %c0_i32_0 = arith.constant 0 : i32
    %c0_i32_1 = arith.constant 0 : i32
    return %c0_i32, %c0_i32_0 : i32, i32
  }
  func.func @transform_10(%arg0: i32) -> (i32, i32, i32) {
    %c0_i32 = arith.constant 0 : i32
    %c0_i32_0 = arith.constant 0 : i32
    %c0_i32_1 = arith.constant 0 : i32
    return %arg0, %c0_i32, %c0_i32_0 : i32, i32, i32
  }
}

module attributes {stable_mosaic.version = 11 : i64} {
  func.func @vae_neg_elbo_kernel(%arg0: i32, %arg1: memref<32x256xbf16, #tpu.memory_space<vmem>>, %arg2: memref<32x128xf32, #tpu.memory_space<vmem>>, %arg3: memref<256x128xbf16, #tpu.memory_space<vmem>>, %arg4: memref<1x128xf32, #tpu.memory_space<vmem>>, %arg5: memref<128x256xbf16, #tpu.memory_space<vmem>>, %arg6: memref<1x256xf32, #tpu.memory_space<vmem>>, %arg7: memref<128x128xbf16, #tpu.memory_space<vmem>>, %arg8: memref<1x128xf32, #tpu.memory_space<vmem>>, %arg9: memref<128x256xbf16, #tpu.memory_space<vmem>>, %arg10: memref<1x256xf32, #tpu.memory_space<vmem>>, %arg11: memref<1x8x128xf32, #tpu.memory_space<vmem>>) attributes {dimension_semantics = [#tpu.dimension_semantics<parallel>], iteration_bounds = array<i64: 1>, scalar_prefetch = 0 : i64, scratch_operands = 0 : i64, tpu.core_type = #tpu.core_type<tc>, window_params = [{transform_indices = @transform_0, window_bounds = array<i64: 32, 256>}, {transform_indices = @transform_1, window_bounds = array<i64: 32, 128>}, {pipeline_mode = #tpu.pipeline_mode<synchronous>, transform_indices = @transform_2, window_bounds = array<i64: 256, 128>}, {pipeline_mode = #tpu.pipeline_mode<synchronous>, transform_indices = @transform_3, window_bounds = array<i64: 1, 128>}, {pipeline_mode = #tpu.pipeline_mode<synchronous>, transform_indices = @transform_4, window_bounds = array<i64: 128, 256>}, {pipeline_mode = #tpu.pipeline_mode<synchronous>, transform_indices = @transform_5, window_bounds = array<i64: 1, 256>}, {pipeline_mode = #tpu.pipeline_mode<synchronous>, transform_indices = @transform_6, window_bounds = array<i64: 128, 128>}, {pipeline_mode = #tpu.pipeline_mode<synchronous>, transform_indices = @transform_7, window_bounds = array<i64: 1, 128>}, {pipeline_mode = #tpu.pipeline_mode<synchronous>, transform_indices = @transform_8, window_bounds = array<i64: 128, 256>}, {pipeline_mode = #tpu.pipeline_mode<synchronous>, transform_indices = @transform_9, window_bounds = array<i64: 1, 256>}, {transform_indices = @transform_10, window_bounds = array<i64: 1, 8, 128>}]} {
    %c0 = arith.constant 0 : index
    %c0_0 = arith.constant 0 : index
    %0 = vector.load %arg1[%c0, %c0_0] : memref<32x256xbf16, #tpu.memory_space<vmem>>, vector<32x256xbf16>
    %1 = arith.extf %0 : vector<32x256xbf16> to vector<32x256xf32>
    %c0_1 = arith.constant 0 : index
    %c0_2 = arith.constant 0 : index
    %2 = vector.load %arg2[%c0_1, %c0_2] : memref<32x128xf32, #tpu.memory_space<vmem>>, vector<32x128xf32>
    %c0_3 = arith.constant 0 : index
    %c0_4 = arith.constant 0 : index
    %3 = vector.load %arg3[%c0_3, %c0_4] : memref<256x128xbf16, #tpu.memory_space<vmem>>, vector<256x128xbf16>
    %cst = arith.constant dense<0.000000e+00> : vector<32x128xf32>
    %4 = tpu.matmul %0, %3, %cst {dimension_numbers = #tpu.dot_dimension_numbers<[1], [0], [0], [1], [0, 0, 1, 1], [], []>} : vector<32x256xbf16>, vector<256x128xbf16>, vector<32x128xf32> -> vector<32x128xf32>
    %c0_5 = arith.constant 0 : index
    %c0_6 = arith.constant 0 : index
    %5 = vector.load %arg4[%c0_5, %c0_6] : memref<1x128xf32, #tpu.memory_space<vmem>>, vector<1x128xf32>
    %6 = vector.broadcast %5 : vector<1x128xf32> to vector<32x128xf32>
    %7 = arith.addf %4, %6 : vector<32x128xf32>
    %cst_7 = arith.constant 0.000000e+00 : f32
    %8 = vector.broadcast %cst_7 : f32 to vector<32x128xf32>
    %9 = arith.maximumf %7, %8 : vector<32x128xf32>
    %10 = arith.truncf %9 : vector<32x128xf32> to vector<32x128xbf16>
    %c0_8 = arith.constant 0 : index
    %c0_9 = arith.constant 0 : index
    %11 = vector.load %arg5[%c0_8, %c0_9] : memref<128x256xbf16, #tpu.memory_space<vmem>>, vector<128x256xbf16>
    %cst_10 = arith.constant dense<0.000000e+00> : vector<32x256xf32>
    %12 = tpu.matmul %10, %11, %cst_10 {dimension_numbers = #tpu.dot_dimension_numbers<[1], [0], [0], [1], [0, 0, 1, 1], [], []>} : vector<32x128xbf16>, vector<128x256xbf16>, vector<32x256xf32> -> vector<32x256xf32>
    %c0_11 = arith.constant 0 : index
    %c0_12 = arith.constant 0 : index
    %13 = vector.load %arg6[%c0_11, %c0_12] : memref<1x256xf32, #tpu.memory_space<vmem>>, vector<1x256xf32>
    %14 = vector.broadcast %13 : vector<1x256xf32> to vector<32x256xf32>
    %15 = arith.addf %12, %14 : vector<32x256xf32>
    %16 = vector.extract_strided_slice %15 {offsets = [0, 0], sizes = [32, 128], strides = [1, 1]} : vector<32x256xf32> to vector<32x128xf32>
    %17 = vector.extract_strided_slice %15 {offsets = [0, 128], sizes = [32, 128], strides = [1, 1]} : vector<32x256xf32> to vector<32x128xf32>
    %18 = math.exp %17 : vector<32x128xf32>
    %19 = arith.mulf %18, %2 : vector<32x128xf32>
    %20 = arith.addf %16, %19 : vector<32x128xf32>
    %21 = arith.truncf %20 : vector<32x128xf32> to vector<32x128xbf16>
    %c0_13 = arith.constant 0 : index
    %c0_14 = arith.constant 0 : index
    %22 = vector.load %arg7[%c0_13, %c0_14] : memref<128x128xbf16, #tpu.memory_space<vmem>>, vector<128x128xbf16>
    %cst_15 = arith.constant dense<0.000000e+00> : vector<32x128xf32>
    %23 = tpu.matmul %21, %22, %cst_15 {dimension_numbers = #tpu.dot_dimension_numbers<[1], [0], [0], [1], [0, 0, 1, 1], [], []>} : vector<32x128xbf16>, vector<128x128xbf16>, vector<32x128xf32> -> vector<32x128xf32>
    %c0_16 = arith.constant 0 : index
    %c0_17 = arith.constant 0 : index
    %24 = vector.load %arg8[%c0_16, %c0_17] : memref<1x128xf32, #tpu.memory_space<vmem>>, vector<1x128xf32>
    %25 = vector.broadcast %24 : vector<1x128xf32> to vector<32x128xf32>
    %26 = arith.addf %23, %25 : vector<32x128xf32>
    %cst_18 = arith.constant 0.000000e+00 : f32
    %27 = vector.broadcast %cst_18 : f32 to vector<32x128xf32>
    %28 = arith.maximumf %26, %27 : vector<32x128xf32>
    %29 = arith.truncf %28 : vector<32x128xf32> to vector<32x128xbf16>
    %c0_19 = arith.constant 0 : index
    %c0_20 = arith.constant 0 : index
    %30 = vector.load %arg9[%c0_19, %c0_20] : memref<128x256xbf16, #tpu.memory_space<vmem>>, vector<128x256xbf16>
    %cst_21 = arith.constant dense<0.000000e+00> : vector<32x256xf32>
    %31 = tpu.matmul %29, %30, %cst_21 {dimension_numbers = #tpu.dot_dimension_numbers<[1], [0], [0], [1], [0, 0, 1, 1], [], []>} : vector<32x128xbf16>, vector<128x256xbf16>, vector<32x256xf32> -> vector<32x256xf32>
    %c0_22 = arith.constant 0 : index
    %c0_23 = arith.constant 0 : index
    %32 = vector.load %arg10[%c0_22, %c0_23] : memref<1x256xf32, #tpu.memory_space<vmem>>, vector<1x256xf32>
    %33 = vector.broadcast %32 : vector<1x256xf32> to vector<32x256xf32>
    %34 = arith.addf %31, %33 : vector<32x256xf32>
    %35 = arith.mulf %1, %34 : vector<32x256xf32>
    %cst_24 = arith.constant 0.000000e+00 : f32
    %36 = vector.broadcast %cst_24 : f32 to vector<32x256xf32>
    %37 = arith.maximumf %34, %36 : vector<32x256xf32>
    %38 = vector.broadcast %cst_24 : f32 to vector<32x256xf32>
    %39 = arith.subf %34, %38 : vector<32x256xf32>
    %40 = arith.cmpf one, %39, %39 : vector<32x256xf32>
    %41 = vector.broadcast %cst_24 : f32 to vector<32x256xf32>
    %42 = arith.addf %34, %41 : vector<32x256xf32>
    %43 = math.absf %39 : vector<32x256xf32>
    %cst_25 = arith.constant 0.000000e+00 : f32
    %44 = vector.broadcast %cst_25 : f32 to vector<32x256xf32>
    %45 = arith.subf %44, %43 : vector<32x256xf32>
    %46 = math.exp %45 : vector<32x256xf32>
    %47 = math.log1p %46 : vector<32x256xf32>
    %48 = arith.addf %37, %47 : vector<32x256xf32>
    %49 = arith.select %40, %42, %48 : vector<32x256xi1>, vector<32x256xf32>
    %50 = arith.subf %35, %49 : vector<32x256xf32>
    %cst_26 = arith.constant dense<0.000000e+00> : vector<32xf32>
    %51 = vector.multi_reduction <add>, %50, %cst_26 [1] : vector<32x256xf32> to vector<32xf32>
    %52 = vector.shape_cast %51 : vector<32xf32> to vector<32x1xf32>
    %53 = arith.mulf %18, %18 : vector<32x128xf32>
    %54 = arith.mulf %16, %16 : vector<32x128xf32>
    %55 = arith.addf %53, %54 : vector<32x128xf32>
    %cst_27 = arith.constant 1.000000e+00 : f32
    %56 = vector.broadcast %cst_27 : f32 to vector<32x128xf32>
    %57 = arith.subf %55, %56 : vector<32x128xf32>
    %cst_28 = arith.constant 5.000000e-01 : f32
    %58 = vector.broadcast %cst_28 : f32 to vector<32x128xf32>
    %59 = arith.mulf %58, %57 : vector<32x128xf32>
    %60 = arith.subf %59, %17 : vector<32x128xf32>
    %cst_29 = arith.constant dense<0.000000e+00> : vector<32xf32>
    %61 = vector.multi_reduction <add>, %60, %cst_29 [1] : vector<32x128xf32> to vector<32xf32>
    %62 = vector.shape_cast %61 : vector<32xf32> to vector<32x1xf32>
    %63 = arith.subf %52, %62 : vector<32x1xf32>
    %64 = vector.shape_cast %63 : vector<32x1xf32> to vector<1x32x1xf32>
    %cst_30 = arith.constant dense<0.000000e+00> : vector<1xf32>
    %65 = vector.multi_reduction <add>, %64, %cst_30 [1, 2] : vector<1x32x1xf32> to vector<1xf32>
    %66 = vector.shape_cast %65 : vector<1xf32> to vector<1x1x1xf32>
    %67 = vector.extract %66[0, 0, 0] : f32 from vector<1x1x1xf32>
    %68 = vector.broadcast %67 : f32 to vector<1x8x128xf32>
    %c0_31 = arith.constant 0 : index
    %c0_32 = arith.constant 0 : index
    %c0_33 = arith.constant 0 : index
    %69 = vector.load %arg11[%c0_31, %c0_32, %c0_33] : memref<1x8x128xf32, #tpu.memory_space<vmem>>, vector<1x8x128xf32>
    tpu.vector_store %arg11[%c0_31, %c0_32, %c0_33], %68 {strides = array<i32>} : memref<1x8x128xf32, #tpu.memory_space<vmem>>, vector<1x8x128xf32>,
    return
  }
  func.func @transform_0(%arg0: i32) -> (i32, i32) {
    %c0_i32 = arith.constant 0 : i32
    %c0_i32_0 = arith.constant 0 : i32
    return %arg0, %c0_i32 : i32, i32
  }
  func.func @transform_1(%arg0: i32) -> (i32, i32) {
    %c0_i32 = arith.constant 0 : i32
    %c0_i32_0 = arith.constant 0 : i32
    return %arg0, %c0_i32 : i32, i32
  }
  func.func @transform_2(%arg0: i32) -> (i32, i32) {
    %c0_i32 = arith.constant 0 : i32
    %c0_i32_0 = arith.constant 0 : i32
    %c0_i32_1 = arith.constant 0 : i32
    return %c0_i32, %c0_i32_0 : i32, i32
  }
  func.func @transform_3(%arg0: i32) -> (i32, i32) {
    %c0_i32 = arith.constant 0 : i32
    %c0_i32_0 = arith.constant 0 : i32
    %c0_i32_1 = arith.constant 0 : i32
    return %c0_i32, %c0_i32_0 : i32, i32
  }
  func.func @transform_4(%arg0: i32) -> (i32, i32) {
    %c0_i32 = arith.constant 0 : i32
    %c0_i32_0 = arith.constant 0 : i32
    %c0_i32_1 = arith.constant 0 : i32
    return %c0_i32, %c0_i32_0 : i32, i32
  }
  func.func @transform_5(%arg0: i32) -> (i32, i32) {
    %c0_i32 = arith.constant 0 : i32
    %c0_i32_0 = arith.constant 0 : i32
    %c0_i32_1 = arith.constant 0 : i32
    return %c0_i32, %c0_i32_0 : i32, i32
  }
  func.func @transform_6(%arg0: i32) -> (i32, i32) {
    %c0_i32 = arith.constant 0 : i32
    %c0_i32_0 = arith.constant 0 : i32
    %c0_i32_1 = arith.constant 0 : i32
    return %c0_i32, %c0_i32_0 : i32, i32
  }
  func.func @transform_7(%arg0: i32) -> (i32, i32) {
    %c0_i32 = arith.constant 0 : i32
    %c0_i32_0 = arith.constant 0 : i32
    %c0_i32_1 = arith.constant 0 : i32
    return %c0_i32, %c0_i32_0 : i32, i32
  }
  func.func @transform_8(%arg0: i32) -> (i32, i32) {
    %c0_i32 = arith.constant 0 : i32
    %c0_i32_0 = arith.constant 0 : i32
    %c0_i32_1 = arith.constant 0 : i32
    return %c0_i32, %c0_i32_0 : i32, i32
  }
  func.func @transform_9(%arg0: i32) -> (i32, i32) {
    %c0_i32 = arith.constant 0 : i32
    %c0_i32_0 = arith.constant 0 : i32
    %c0_i32_1 = arith.constant 0 : i32
    return %c0_i32, %c0_i32_0 : i32, i32
  }
  func.func @transform_10(%arg0: i32) -> (i32, i32, i32) {
    %c0_i32 = arith.constant 0 : i32
    %c0_i32_0 = arith.constant 0 : i32
    %c0_i32_1 = arith.constant 0 : i32
    return %arg0, %c0_i32, %c0_i32_0 : i32, i32, i32
  }
}

</mosaic_0001>

<llo_original>
// kernel: tpu_custom_call.1
$region0: #{tpu_custom_call.1}
  #allocation0 [shape = 'u32[]', space=smem, size = 0x4, offset = 0x4, fixed_abs, tag = 'smem constant byte address 0x4 - core index']
  #allocation1 [shape = 'u32[144,128]{1,0:T(1,128)}', space=vmem, size = 0x12000, scoped, tag = 'internal scratch']
  %s0 = inlined_call_operand.hbm [shape: bf16[32,256], index: 0, kind: input, shape index: {}]
  %s1 = inlined_call_operand.hbm [shape: f32[32,128], index: 1, kind: input, shape index: {}]
  %s2 = inlined_call_operand.hbm [shape: bf16[256,128], index: 2, kind: input, shape index: {}]
  %s3 = inlined_call_operand.vmem [shape: f32[1,128], index: 3, kind: input, shape index: {}]
  %s4 = inlined_call_operand.hbm [shape: bf16[128,256], index: 4, kind: input, shape index: {}]
  %s5 = inlined_call_operand.vmem [shape: f32[1,256], index: 5, kind: input, shape index: {}]
  %s6 = inlined_call_operand.hbm [shape: bf16[128,128], index: 6, kind: input, shape index: {}]
  %s7 = inlined_call_operand.vmem [shape: f32[1,128], index: 7, kind: input, shape index: {}]
  %s8 = inlined_call_operand.hbm [shape: bf16[128,256], index: 8, kind: input, shape index: {}]
  %s9 = inlined_call_operand.vmem [shape: f32[1,256], index: 9, kind: input, shape index: {}]
  %s10 = inlined_call_operand.hbm [shape: f32[1,8,128], index: 10, kind: output, shape index: {}]
  %s11 = sld [smem:[#allocation0]]
  $region74: #{tpu_custom_call.1} parent=0
    _
  %s13 = ssub.s32 1, %s11
  %s14 = scalar_select 0, %s13, %s11
  $region1: #{tpu_custom_call.1} parent=0
    #allocation2 [shape = 'u8[16384]{0}', space=vmem, size = 0x4000, scoped, tag = 'input window, operand 0, single buffered']
    #allocation3 [shape = 's32[1]{0}', space=sflag, size = 0x4, scoped, tag = 'scoped memory for tpu_custom_call.1']
    #allocation4 [shape = 's32[1]{0}', space=sflag, size = 0x4, scoped, tag = 'scoped memory for tpu_custom_call.1']
    #allocation5 [shape = 'u8[16384]{0}', space=vmem, size = 0x4000, scoped, tag = 'input window, operand 1, single buffered']
    #allocation6 [shape = 's32[1]{0}', space=sflag, size = 0x4, scoped, tag = 'scoped memory for tpu_custom_call.1']
    #allocation7 [shape = 'u8[65536]{0}', space=vmem, size = 0x10000, scoped, tag = 'input window, operand 2, single buffered']
    #allocation8 [shape = 'u8[65536]{0}', space=vmem, size = 0x10000, scoped, tag = 'input window, operand 4, single buffered']
    #allocation9 [shape = 's32[1]{0}', space=sflag, size = 0x4, scoped, tag = 'scoped memory for tpu_custom_call.1']
    #allocation10 [shape = 'u8[32768]{0}', space=vmem, size = 0x8000, scoped, tag = 'input window, operand 6, single buffered']
    #allocation11 [shape = 'u8[65536]{0}', space=vmem, size = 0x10000, scoped, tag = 'input window, operand 8, single buffered']
    #allocation12 [shape = 's32[1]{0}', space=sflag, size = 0x4, scoped, tag = 'scoped memory for tpu_custom_call.1']
    #allocation13 [shape = 'u8[4096]{0}', space=vmem, size = 0x1000, scoped, tag = 'output window, operand 0, single buffered']
    %15 = vsyncpa [#allocation3], 0
    %16 = vsyncpa [#allocation6], 0
    %17 = vsyncpa [#allocation9], 0
    %18 = vsyncpa [#allocation12], 0
    %19 = vsyncpa [#allocation4], 0
    // Predicated region
    $region2: #{tpu_custom_call.1} parent=1 // pred_check
      _
    $region3: #{tpu_custom_call.1} parent=1 // pred_check_branch
      %21 = sbr.rel (0) target = $region5
    $region4: #{tpu_custom_call.1} parent=1 // pred_region
      %s23 = ssub.s32 512, 512
      %24 = vsyncadd [#allocation3], %s23
      %s25 = sshll.u32 [#allocation2], 4
      %s26 = int_to_ptr.vmem [resolvable:$true] %s25
      %31 = dma.hbm_to_vmem [thread:$0]  %s0, 512, %s26, [#allocation3], 128, 128, 8
    $region5: #{tpu_custom_call.1} parent=1 // pred_fallthru
      _
    // Predicated region
    $region6: #{tpu_custom_call.1} parent=1 // pred_check
      _
    $region7: #{tpu_custom_call.1} parent=1 // pred_check_branch
      %33 = sbr.rel (0) target = $region9
    $region8: #{tpu_custom_call.1} parent=1 // pred_region
      %s35 = ssub.s32 512, 512
      %36 = vsyncadd [#allocation6], %s35
      %s37 = sshll.u32 [#allocation5], 4
      %s38 = int_to_ptr.vmem [resolvable:$true] %s37
      %43 = dma.hbm_to_vmem [thread:$0]  %s1, 512, %s38, [#allocation6], 128, 128, 8
    $region9: #{tpu_custom_call.1} parent=1 // pred_fallthru
      _
    // Predicated region
    $region10: #{tpu_custom_call.1} parent=1 // pred_check
      _
    $region11: #{tpu_custom_call.1} parent=1 // pred_check_branch
      %45 = sbr.rel (0) target = $region13
    $region12: #{tpu_custom_call.1} parent=1 // pred_region
      %s47 = ssub.s32 2048, 2048
      %48 = vsyncadd [#allocation6], %s47
      %s49 = sshll.u32 [#allocation7], 4
      %s50 = int_to_ptr.vmem [resolvable:$true] %s49
      %55 = dma.hbm_to_vmem [thread:$0]  %s2, 2048, %s50, [#allocation6], 64, 64, 4
    $region13: #{tpu_custom_call.1} parent=1 // pred_fallthru
      _
    // Predicated region
    $region14: #{tpu_custom_call.1} parent=1 // pred_check
      _
    $region15: #{tpu_custom_call.1} parent=1 // pred_check_branch
      %57 = sbr.rel (0) target = $region17
    $region16: #{tpu_custom_call.1} parent=1 // pred_region
      _
    $region17: #{tpu_custom_call.1} parent=1 // pred_fallthru
      _
    // Predicated region
    $region18: #{tpu_custom_call.1} parent=1 // pred_check
      _
    $region19: #{tpu_custom_call.1} parent=1 // pred_check_branch
      %59 = sbr.rel (0) target = $region21
    $region20: #{tpu_custom_call.1} parent=1 // pred_region
      %s61 = ssub.s32 2048, 2048
      %62 = vsyncadd [#allocation9], %s61
      %s63 = sshll.u32 [#allocation8], 4
      %s64 = int_to_ptr.vmem [resolvable:$true] %s63
      %69 = dma.hbm_to_vmem [thread:$0]  %s4, 2048, %s64, [#allocation9], 128, 128, 8
    $region21: #{tpu_custom_call.1} parent=1 // pred_fallthru
      _
    // Predicated region
    $region22: #{tpu_custom_call.1} parent=1 // pred_check
      _
    $region23: #{tpu_custom_call.1} parent=1 // pred_check_branch
      %71 = sbr.rel (0) target = $region25
    $region24: #{tpu_custom_call.1} parent=1 // pred_region
      _
    $region25: #{tpu_custom_call.1} parent=1 // pred_fallthru
      _
    // Predicated region
    $region26: #{tpu_custom_call.1} parent=1 // pred_check
      _
    $region27: #{tpu_custom_call.1} parent=1 // pred_check_branch
      %73 = sbr.rel (0) target = $region29
    $region28: #{tpu_custom_call.1} parent=1 // pred_region
      %s75 = ssub.s32 1024, 1024
      %76 = vsyncadd [#allocation9], %s75
      %s77 = sshll.u32 [#allocation10], 4
      %s78 = int_to_ptr.vmem [resolvable:$true] %s77
      %83 = dma.hbm_to_vmem [thread:$0]  %s6, 1024, %s78, [#allocation9], 64, 64, 4
    $region29: #{tpu_custom_call.1} parent=1 // pred_fallthru
      _
    // Predicated region
    $region30: #{tpu_custom_call.1} parent=1 // pred_check
      _
    $region31: #{tpu_custom_call.1} parent=1 // pred_check_branch
      %85 = sbr.rel (0) target = $region33
    $region32: #{tpu_custom_call.1} parent=1 // pred_region
      _
    $region33: #{tpu_custom_call.1} parent=1 // pred_fallthru
      _
    // Predicated region
    $region34: #{tpu_custom_call.1} parent=1 // pred_check
      _
    $region35: #{tpu_custom_call.1} parent=1 // pred_check_branch
      %87 = sbr.rel (0) target = $region37
    $region36: #{tpu_custom_call.1} parent=1 // pred_region
      %s89 = ssub.s32 2048, 2048
      %90 = vsyncadd [#allocation12], %s89
      %s91 = sshll.u32 [#allocation11], 4
      %s92 = int_to_ptr.vmem [resolvable:$true] %s91
      %97 = dma.hbm_to_vmem [thread:$0]  %s8, 2048, %s92, [#allocation12], 128, 128, 8
    $region37: #{tpu_custom_call.1} parent=1 // pred_fallthru
      _
    // Predicated region
    $region38: #{tpu_custom_call.1} parent=1 // pred_check
      _
    $region39: #{tpu_custom_call.1} parent=1 // pred_check_branch
      %99 = sbr.rel (0) target = $region41
    $region40: #{tpu_custom_call.1} parent=1 // pred_region
      _
    $region41: #{tpu_custom_call.1} parent=1 // pred_fallthru
      _
    // Predicated region
    $region42: #{tpu_custom_call.1} parent=1 // pred_check
      _
    $region43: #{tpu_custom_call.1} parent=1 // pred_check_branch
      %101 = sbr.rel (0) target = $region45
    $region44: #{tpu_custom_call.1} parent=1 // pred_region
      %102 = dma.done [#allocation3], 512
    $region45: #{tpu_custom_call.1} parent=1 // pred_fallthru
      _
    // Predicated region
    $region46: #{tpu_custom_call.1} parent=1 // pred_check
      _
    $region47: #{tpu_custom_call.1} parent=1 // pred_check_branch
      %104 = sbr.rel (0) target = $region49
    $region48: #{tpu_custom_call.1} parent=1 // pred_region
      %105 = dma.done [#allocation6], 512
    $region49: #{tpu_custom_call.1} parent=1 // pred_fallthru
      _
    // Predicated region
    $region50: #{tpu_custom_call.1} parent=1 // pred_check
      _
    $region51: #{tpu_custom_call.1} parent=1 // pred_check_branch
      %107 = sbr.rel (0) target = $region53
    $region52: #{tpu_custom_call.1} parent=1 // pred_region
      %108 = dma.done [#allocation6], 2048
    $region53: #{tpu_custom_call.1} parent=1 // pred_fallthru
      _
    // Predicated region
    $region54: #{tpu_custom_call.1} parent=1 // pred_check
      _
    $region55: #{tpu_custom_call.1} parent=1 // pred_check_branch
      %110 = sbr.rel (0) target = $region57
    $region56: #{tpu_custom_call.1} parent=1 // pred_region
      %111 = dma.done [#allocation9], 2048
    $region57: #{tpu_custom_call.1} parent=1 // pred_fallthru
      _
    // Predicated region
    $region58: #{tpu_custom_call.1} parent=1 // pred_check
      _
    $region59: #{tpu_custom_call.1} parent=1 // pred_check_branch
      %113 = sbr.rel (0) target = $region61
    $region60: #{tpu_custom_call.1} parent=1 // pred_region
      %114 = dma.done [#allocation9], 1024
    $region61: #{tpu_custom_call.1} parent=1 // pred_fallthru
      _
    // Predicated region
    $region62: #{tpu_custom_call.1} parent=1 // pred_check
      _
    $region63: #{tpu_custom_call.1} parent=1 // pred_check_branch
      %116 = sbr.rel (0) target = $region65
    $region64: #{tpu_custom_call.1} parent=1 // pred_region
      %117 = dma.done [#allocation12], 2048
    $region65: #{tpu_custom_call.1} parent=1 // pred_fallthru
      _
    %v119 = vld [vmem:[#allocation2] sm:$0xff]
    %v120 = vld [vmem:[#allocation2 + $0x8] sm:$0xff]
    %v121 = vld [vmem:[#allocation2 + $0x10] sm:$0xff]
    %v122 = vld [vmem:[#allocation2 + $0x18] sm:$0xff]
    %v123 = vunpack.c.l.bf16 %v119
    %v124 = vunpack.c.h.bf16 %v119
    %v125 = vunpack.c.l.bf16 %v120
    %v126 = vunpack.c.h.bf16 %v120
    %v127 = vunpack.c.l.bf16 %v121
    %v128 = vunpack.c.h.bf16 %v121
    %v129 = vunpack.c.l.bf16 %v122
    %v130 = vunpack.c.h.bf16 %v122
    %v131 = vld [vmem:[#allocation5] sm:$0xff]
    %v132 = vld [vmem:[#allocation5 + $0x8] sm:$0xff]
    %v133 = vld [vmem:[#allocation5 + $0x10] sm:$0xff]
    %v134 = vld [vmem:[#allocation5 + $0x18] sm:$0xff]
    %v135 = vld [vmem:[#allocation7] sm:$0xf]
    %v136 = vld [vmem:[#allocation7 + $0x4] sm:$0xf]
    %v137 = vld [vmem:[#allocation7 + $0x8] sm:$0xf]
    %v138 = vld [vmem:[#allocation7 + $0xc] sm:$0xf]
    %v139 = vld [vmem:[#allocation7 + $0x10] sm:$0xf]
    %v140 = vld [vmem:[#allocation7 + $0x14] sm:$0xf]
    %v141 = vld [vmem:[#allocation7 + $0x18] sm:$0xf]
    %v142 = vld [vmem:[#allocation7 + $0x1c] sm:$0xf]
    %v143 = vld [vmem:[#allocation7 + $0x20] sm:$0xf]
    %v144 = vld [vmem:[#allocation7 + $0x24] sm:$0xf]
    %v145 = vld [vmem:[#allocation7 + $0x28] sm:$0xf]
    %v146 = vld [vmem:[#allocation7 + $0x2c] sm:$0xf]
    %v147 = vld [vmem:[#allocation7 + $0x30] sm:$0xf]
    %v148 = vld [vmem:[#allocation7 + $0x34] sm:$0xf]
    %v149 = vld [vmem:[#allocation7 + $0x38] sm:$0xf]
    %v150 = vld [vmem:[#allocation7 + $0x3c] sm:$0xf]
    %v151 = vld [vmem:[#allocation7 + $0x40] sm:$0xf]
    %v152 = vld [vmem:[#allocation7 + $0x44] sm:$0xf]
    %v153 = vld [vmem:[#allocation7 + $0x48] sm:$0xf]
    %v154 = vld [vmem:[#allocation7 + $0x4c] sm:$0xf]
    %v155 = vld [vmem:[#allocation7 + $0x50] sm:$0xf]
    %v156 = vld [vmem:[#allocation7 + $0x54] sm:$0xf]
    %v157 = vld [vmem:[#allocation7 + $0x58] sm:$0xf]
    %v158 = vld [vmem:[#allocation7 + $0x5c] sm:$0xf]
    %v159 = vld [vmem:[#allocation7 + $0x60] sm:$0xf]
    %v160 = vld [vmem:[#allocation7 + $0x64] sm:$0xf]
    %v161 = vld [vmem:[#allocation7 + $0x68] sm:$0xf]
    %v162 = vld [vmem:[#allocation7 + $0x6c] sm:$0xf]
    %v163 = vld [vmem:[#allocation7 + $0x70] sm:$0xf]
    %v164 = vld [vmem:[#allocation7 + $0x74] sm:$0xf]
    %v165 = vld [vmem:[#allocation7 + $0x78] sm:$0xf]
    %v166 = vld [vmem:[#allocation7 + $0x7c] sm:$0xf]
    %v167 = vld [vmem:[%s3] sm:$0x1]
    %v169 = vlaneseq
    %v170 = vshrl.u32 %v169, 7
    %v171 = vsub.s32 0, %v170
    %v172 = vrot.slane %v167, %v171
    %v178 = vunpack.c.l.b16 %v119
    %v179 = vunpack.c.h.b16 %v119
    %v180 = vunpack.c.l.b16 %v120
    %v181 = vunpack.c.h.b16 %v120
    %v182 = vunpack.c.l.b16 %v121
    %v183 = vunpack.c.h.b16 %v121
    %v184 = vunpack.c.l.b16 %v122
    %v185 = vunpack.c.h.b16 %v122
    %v186 = vpack.c.b16 %v180, %v178
    %v187 = vpack.c.b16 %v181, %v179
    %v188 = vpack.c.b16 %v184, %v182
    %v189 = vpack.c.b16 %v185, %v183
    %v226 = vunpack.c.l.b16 %v135
    %v227 = vunpack.c.l.b16 %v136
    %v228 = vunpack.c.l.b16 %v137
    %v229 = vunpack.c.l.b16 %v138
    %v230 = vunpack.c.l.b16 %v139
    %v231 = vunpack.c.l.b16 %v140
    %v232 = vunpack.c.l.b16 %v141
    %v233 = vunpack.c.l.b16 %v142
    %v234 = vunpack.c.l.b16 %v143
    %v235 = vunpack.c.l.b16 %v144
    %v236 = vunpack.c.l.b16 %v145
    %v237 = vunpack.c.l.b16 %v146
    %v238 = vunpack.c.l.b16 %v147
    %v239 = vunpack.c.l.b16 %v148
    %v240 = vunpack.c.l.b16 %v149
    %v241 = vunpack.c.l.b16 %v150
    %v242 = vunpack.c.l.b16 %v151
    %v243 = vunpack.c.l.b16 %v152
    %v244 = vunpack.c.l.b16 %v153
    %v245 = vunpack.c.l.b16 %v154
    %v246 = vunpack.c.l.b16 %v155
    %v247 = vunpack.c.l.b16 %v156
    %v248 = vunpack.c.l.b16 %v157
    %v249 = vunpack.c.l.b16 %v158
    %v250 = vunpack.c.l.b16 %v159
    %v251 = vunpack.c.l.b16 %v160
    %v252 = vunpack.c.l.b16 %v161
    %v253 = vunpack.c.l.b16 %v162
    %v254 = vunpack.c.l.b16 %v163
    %v255 = vunpack.c.l.b16 %v164
    %v256 = vunpack.c.l.b16 %v165
    %v257 = vunpack.c.l.b16 %v166
    %v258 = vpack.c.b16 %v227, %v226
    %v259 = vpack.c.b16 %v229, %v228
    %v260 = vpack.c.b16 %v231, %v230
    %v261 = vpack.c.b16 %v233, %v232
    %v262 = vpack.c.b16 %v235, %v234
    %v263 = vpack.c.b16 %v237, %v236
    %v264 = vpack.c.b16 %v239, %v238
    %v265 = vpack.c.b16 %v241, %v240
    %v266 = vpack.c.b16 %v243, %v242
    %v267 = vpack.c.b16 %v245, %v244
    %v268 = vpack.c.b16 %v247, %v246
    %v269 = vpack.c.b16 %v249, %v248
    %v270 = vpack.c.b16 %v251, %v250
    %v271 = vpack.c.b16 %v253, %v252
    %v272 = vpack.c.b16 %v255, %v254
    %v273 = vpack.c.b16 %v257, %v256
    %290 = vmatprep.subr.bf16.mxu0 0
    %291 = vmatpush1.bf16.msra.mxu0 %v258
    %292 = vmatprep.subr.bf16.mxu0 0
    %293 = vmatpush1.bf16.msra.mxu0 %v259
    %294 = vmatprep.subr.bf16.mxu0 0
    %295 = vmatpush1.bf16.msra.mxu0 %v260
    %296 = vmatprep.subr.bf16.mxu0 0
    %297 = vmatpush1.bf16.msra.mxu0 %v261
    %298 = vmatprep.subr.bf16.mxu0 0
    %299 = vmatpush1.bf16.msra.mxu0 %v262
    %300 = vmatprep.subr.bf16.mxu0 0
    %301 = vmatpush1.bf16.msra.mxu0 %v263
    %302 = vmatprep.subr.bf16.mxu0 0
    %303 = vmatpush1.bf16.msra.mxu0 %v264
    %304 = vmatprep.subr.bf16.mxu0 0
    %305 = vmatpush1.bf16.msra.mxu0 %v265
    %306 = vmatprep.subr.bf16.mxu0 0
    %307 = vmatpush1.bf16.msra.mxu0 %v266
    %308 = vmatprep.subr.bf16.mxu0 0
    %309 = vmatpush1.bf16.msra.mxu0 %v267
    %310 = vmatprep.subr.bf16.mxu0 0
    %311 = vmatpush1.bf16.msra.mxu0 %v268
    %312 = vmatprep.subr.bf16.mxu0 0
    %313 = vmatpush1.bf16.msra.mxu0 %v269
    %314 = vmatprep.subr.bf16.mxu0 0
    %315 = vmatpush1.bf16.msra.mxu0 %v270
    %316 = vmatprep.subr.bf16.mxu0 0
    %317 = vmatpush1.bf16.msra.mxu0 %v271
    %318 = vmatprep.subr.bf16.mxu0 0
    %319 = vmatpush1.bf16.msra.mxu0 %v272
    %320 = vmatprep.subr.bf16.mxu0 0
    %321 = vmatpush1.bf16.msra.mxu0 %v273
    %322 = vmatprep.mubr.bf16.mxu0 %v187
    %323 = vmatmul.mubr.bf16.gmra.mrb[0].mxu0 %v186
    %v324 = vpop.f32.mrb[0].mxu0
    %v325 = vadd.f32 %v172, %v324
    %v326 = vpop.f32.mrb[0].mxu0
    %v327 = vpop.f32.mrb[0].mxu0
    %v328 = vadd.f32 %v172, %v327
    %v329 = vpop.f32.mrb[0].mxu0
    %330 = vmatprep.mubr.bf16.mxu0 %v189
    %331 = vmatmul.mubr.bf16.gmra.mrb[0].mxu0 %v188
    %v332 = vpop.f32.mrb[0].mxu0
    %v333 = vadd.f32 %v172, %v332
    %v334 = vpop.f32.mrb[0].mxu0
    %v335 = vpop.f32.mrb[0].mxu0
    %v336 = vadd.f32 %v172, %v335
    %v337 = vpop.f32.mrb[0].mxu0
    %338 = vdwg.mxu0
    %v339 = vmax.f32 %v325, 0.0
    %v340 = vmax.f32 %v328, 0.0
    %v341 = vmax.f32 %v333, 0.0
    %v342 = vmax.f32 %v336, 0.0
    %v343 = vpack.c.bf16 %v340, %v339
    %v344 = vpack.c.bf16 %v342, %v341
    %v345 = vld [vmem:[#allocation8] sm:$0xff]
    %v346 = vld [vmem:[#allocation8 + $0x8] sm:$0xff]
    %v347 = vld [vmem:[#allocation8 + $0x10] sm:$0xff]
    %v348 = vld [vmem:[#allocation8 + $0x18] sm:$0xff]
    %v349 = vld [vmem:[#allocation8 + $0x20] sm:$0xff]
    %v350 = vld [vmem:[#allocation8 + $0x28] sm:$0xff]
    %v351 = vld [vmem:[#allocation8 + $0x30] sm:$0xff]
    %v352 = vld [vmem:[#allocation8 + $0x38] sm:$0xff]
    %v353 = vld [vmem:[#allocation8 + $0x40] sm:$0xff]
    %v354 = vld [vmem:[#allocation8 + $0x48] sm:$0xff]
    %v355 = vld [vmem:[#allocation8 + $0x50] sm:$0xff]
    %v356 = vld [vmem:[#allocation8 + $0x58] sm:$0xff]
    %v357 = vld [vmem:[#allocation8 + $0x60] sm:$0xff]
    %v358 = vld [vmem:[#allocation8 + $0x68] sm:$0xff]
    %v359 = vld [vmem:[#allocation8 + $0x70] sm:$0xff]
    %v360 = vld [vmem:[#allocation8 + $0x78] sm:$0xff]
    %v361 = vld [vmem:[%s5] sm:$0x3]
    %v363 = vlaneseq
    %v364 = vshrl.u32 %v363, 7
    %v365 = vsub.s32 0, %v364
    %v366 = vrot.slane %v361, %v365
    %v367 = vlaneseq
    %v368 = vshrl.u32 %v367, 7
    %v369 = vsub.s32 1, %v368
    %v370 = vrot.slane %v361, %v369
    %v389 = vunpack.c.l.b16 %v345
    %v390 = vunpack.c.h.b16 %v345
    %v391 = vunpack.c.l.b16 %v346
    %v392 = vunpack.c.h.b16 %v346
    %v393 = vunpack.c.l.b16 %v347
    %v394 = vunpack.c.h.b16 %v347
    %v395 = vunpack.c.l.b16 %v348
    %v396 = vunpack.c.h.b16 %v348
    %v397 = vunpack.c.l.b16 %v349
    %v398 = vunpack.c.h.b16 %v349
    %v399 = vunpack.c.l.b16 %v350
    %v400 = vunpack.c.h.b16 %v350
    %v401 = vunpack.c.l.b16 %v351
    %v402 = vunpack.c.h.b16 %v351
    %v403 = vunpack.c.l.b16 %v352
    %v404 = vunpack.c.h.b16 %v352
    %v405 = vunpack.c.l.b16 %v353
    %v406 = vunpack.c.h.b16 %v353
    %v407 = vunpack.c.l.b16 %v354
    %v408 = vunpack.c.h.b16 %v354
    %v409 = vunpack.c.l.b16 %v355
    %v410 = vunpack.c.h.b16 %v355
    %v411 = vunpack.c.l.b16 %v356
    %v412 = vunpack.c.h.b16 %v356
    %v413 = vunpack.c.l.b16 %v357
    %v414 = vunpack.c.h.b16 %v357
    %v415 = vunpack.c.l.b16 %v358
    %v416 = vunpack.c.h.b16 %v358
    %v417 = vunpack.c.l.b16 %v359
    %v418 = vunpack.c.h.b16 %v359
    %v419 = vunpack.c.l.b16 %v360
    %v420 = vunpack.c.h.b16 %v360
    %v421 = vpack.c.b16 %v391, %v389
    %v422 = vpack.c.b16 %v392, %v390
    %v423 = vpack.c.b16 %v395, %v393
    %v424 = vpack.c.b16 %v396, %v394
    %v425 = vpack.c.b16 %v399, %v397
    %v426 = vpack.c.b16 %v400, %v398
    %v427 = vpack.c.b16 %v403, %v401
    %v428 = vpack.c.b16 %v404, %v402
    %v429 = vpack.c.b16 %v407, %v405
    %v430 = vpack.c.b16 %v408, %v406
    %v431 = vpack.c.b16 %v411, %v409
    %v432 = vpack.c.b16 %v412, %v410
    %v433 = vpack.c.b16 %v415, %v413
    %v434 = vpack.c.b16 %v416, %v414
    %v435 = vpack.c.b16 %v419, %v417
    %v436 = vpack.c.b16 %v420, %v418
    %453 = vmatprep.subr.bf16.mxu0 %v422
    %454 = vmatpush1.bf16.msra.mxu0 %v421
    %455 = vmatprep.subr.bf16.mxu0 %v424
    %456 = vmatpush1.bf16.msra.mxu0 %v423
    %457 = vmatprep.subr.bf16.mxu0 %v426
    %458 = vmatpush1.bf16.msra.mxu0 %v425
    %459 = vmatprep.subr.bf16.mxu0 %v428
    %460 = vmatpush1.bf16.msra.mxu0 %v427
    %461 = vmatprep.subr.bf16.mxu0 %v430
    %462 = vmatpush1.bf16.msra.mxu0 %v429
    %463 = vmatprep.subr.bf16.mxu0 %v432
    %464 = vmatpush1.bf16.msra.mxu0 %v431
    %465 = vmatprep.subr.bf16.mxu0 %v434
    %466 = vmatpush1.bf16.msra.mxu0 %v433
    %467 = vmatprep.subr.bf16.mxu0 %v436
    %468 = vmatpush1.bf16.msra.mxu0 %v435
    %469 = vmatprep.subr.bf16.mxu0 0
    %470 = vmatpush1.bf16.msra.mxu0 0
    %471 = vmatprep.subr.bf16.mxu0 0
    %472 = vmatpush1.bf16.msra.mxu0 0
    %473 = vmatprep.subr.bf16.mxu0 0
    %474 = vmatpush1.bf16.msra.mxu0 0
    %475 = vmatprep.subr.bf16.mxu0 0
    %476 = vmatpush1.bf16.msra.mxu0 0
    %477 = vmatprep.subr.bf16.mxu0 0
    %478 = vmatpush1.bf16.msra.mxu0 0
    %479 = vmatprep.subr.bf16.mxu0 0
    %480 = vmatpush1.bf16.msra.mxu0 0
    %481 = vmatprep.subr.bf16.mxu0 0
    %482 = vmatpush1.bf16.msra.mxu0 0
    %483 = vmatprep.subr.bf16.mxu0 0
    %484 = vmatpush1.bf16.msra.mxu0 0
    %485 = vmatprep.mubr.bf16.mxu0 0
    %486 = vmatmul.mubr.bf16.gmra.mrb[0].mxu0 %v343
    %v487 = vpop.f32.mrb[0].mxu0
    %v488 = vadd.f32 %v366, %v487
    %v489 = vpop.f32.mrb[0].mxu0
    %v490 = vadd.f32 %v370, %v489
    %v491 = vpop.f32.mrb[0].mxu0
    %v492 = vadd.f32 %v366, %v491
    %v493 = vpop.f32.mrb[0].mxu0
    %v494 = vadd.f32 %v370, %v493
    %495 = vmatprep.mubr.bf16.mxu0 0
    %496 = vmatmul.mubr.bf16.gmra.mrb[0].mxu0 %v344
    %v497 = vpop.f32.mrb[0].mxu0
    %v498 = vadd.f32 %v366, %v497
    %v499 = vpop.f32.mrb[0].mxu0
    %v500 = vadd.f32 %v370, %v499
    %v501 = vpop.f32.mrb[0].mxu0
    %v502 = vadd.f32 %v366, %v501
    %v503 = vpop.f32.mrb[0].mxu0
    %v504 = vadd.f32 %v370, %v503
    %505 = vdwg.mxu0
    %v506 = vmul.f32 %v490, 1.442695
    %v507 = vpow.pop %v506
    %v508 = vmul.f32 %v494, 1.442695
    %v509 = vpow.pop %v508
    %v510 = vmul.f32 %v500, 1.442695
    %v511 = vpow.pop %v510
    %v512 = vmul.f32 %v504, 1.442695
    %v513 = vpow.pop %v512
    %v514 = vmul.f32 %v507, %v131
    %v515 = vmul.f32 %v509, %v132
    %v516 = vmul.f32 %v511, %v133
    %v517 = vmul.f32 %v513, %v134
    %v518 = vadd.f32 %v488, %v514
    %v519 = vadd.f32 %v492, %v515
    %v520 = vadd.f32 %v498, %v516
    %v521 = vadd.f32 %v502, %v517
    %v522 = vpack.c.bf16 %v519, %v518
    %v523 = vpack.c.bf16 %v521, %v520
    %v524 = vld [vmem:[#allocation10] sm:$0xf]
    %v525 = vld [vmem:[#allocation10 + $0x4] sm:$0xf]
    %v526 = vld [vmem:[#allocation10 + $0x8] sm:$0xf]
    %v527 = vld [vmem:[#allocation10 + $0xc] sm:$0xf]
    %v528 = vld [vmem:[#allocation10 + $0x10] sm:$0xf]
    %v529 = vld [vmem:[#allocation10 + $0x14] sm:$0xf]
    %v530 = vld [vmem:[#allocation10 + $0x18] sm:$0xf]
    %v531 = vld [vmem:[#allocation10 + $0x1c] sm:$0xf]
    %v532 = vld [vmem:[#allocation10 + $0x20] sm:$0xf]
    %v533 = vld [vmem:[#allocation10 + $0x24] sm:$0xf]
    %v534 = vld [vmem:[#allocation10 + $0x28] sm:$0xf]
    %v535 = vld [vmem:[#allocation10 + $0x2c] sm:$0xf]
    %v536 = vld [vmem:[#allocation10 + $0x30] sm:$0xf]
    %v537 = vld [vmem:[#allocation10 + $0x34] sm:$0xf]
    %v538 = vld [vmem:[#allocation10 + $0x38] sm:$0xf]
    %v539 = vld [vmem:[#allocation10 + $0x3c] sm:$0xf]
    %v540 = vld [vmem:[%s7] sm:$0x1]
    %v542 = vlaneseq
    %v543 = vshrl.u32 %v542, 7
    %v544 = vsub.s32 0, %v543
    %v545 = vrot.slane %v540, %v544
    %v563 = vunpack.c.l.b16 %v524
    %v564 = vunpack.c.l.b16 %v525
    %v565 = vunpack.c.l.b16 %v526
    %v566 = vunpack.c.l.b16 %v527
    %v567 = vunpack.c.l.b16 %v528
    %v568 = vunpack.c.l.b16 %v529
    %v569 = vunpack.c.l.b16 %v530
    %v570 = vunpack.c.l.b16 %v531
    %v571 = vunpack.c.l.b16 %v532
    %v572 = vunpack.c.l.b16 %v533
    %v573 = vunpack.c.l.b16 %v534
    %v574 = vunpack.c.l.b16 %v535
    %v575 = vunpack.c.l.b16 %v536
    %v576 = vunpack.c.l.b16 %v537
    %v577 = vunpack.c.l.b16 %v538
    %v578 = vunpack.c.l.b16 %v539
    %v579 = vpack.c.b16 %v564, %v563
    %v580 = vpack.c.b16 %v566, %v565
    %v581 = vpack.c.b16 %v568, %v567
    %v582 = vpack.c.b16 %v570, %v569
    %v583 = vpack.c.b16 %v572, %v571
    %v584 = vpack.c.b16 %v574, %v573
    %v585 = vpack.c.b16 %v576, %v575
    %v586 = vpack.c.b16 %v578, %v577
    %595 = vmatprep.subr.bf16.mxu0 0
    %596 = vmatpush1.bf16.msra.mxu0 %v579
    %597 = vmatprep.subr.bf16.mxu0 0
    %598 = vmatpush1.bf16.msra.mxu0 %v580
    %599 = vmatprep.subr.bf16.mxu0 0
    %600 = vmatpush1.bf16.msra.mxu0 %v581
    %601 = vmatprep.subr.bf16.mxu0 0
    %602 = vmatpush1.bf16.msra.mxu0 %v582
    %603 = vmatprep.subr.bf16.mxu0 0
    %604 = vmatpush1.bf16.msra.mxu0 %v583
    %605 = vmatprep.subr.bf16.mxu0 0
    %606 = vmatpush1.bf16.msra.mxu0 %v584
    %607 = vmatprep.subr.bf16.mxu0 0
    %608 = vmatpush1.bf16.msra.mxu0 %v585
    %609 = vmatprep.subr.bf16.mxu0 0
    %610 = vmatpush1.bf16.msra.mxu0 %v586
    %611 = vmatprep.subr.bf16.mxu0 0
    %612 = vmatpush1.bf16.msra.mxu0 0
    %613 = vmatprep.subr.bf16.mxu0 0
    %614 = vmatpush1.bf16.msra.mxu0 0
    %615 = vmatprep.subr.bf16.mxu0 0
    %616 = vmatpush1.bf16.msra.mxu0 0
    %617 = vmatprep.subr.bf16.mxu0 0
    %618 = vmatpush1.bf16.msra.mxu0 0
    %619 = vmatprep.subr.bf16.mxu0 0
    %620 = vmatpush1.bf16.msra.mxu0 0
    %621 = vmatprep.subr.bf16.mxu0 0
    %622 = vmatpush1.bf16.msra.mxu0 0
    %623 = vmatprep.subr.bf16.mxu0 0
    %624 = vmatpush1.bf16.msra.mxu0 0
    %625 = vmatprep.subr.bf16.mxu0 0
    %626 = vmatpush1.bf16.msra.mxu0 0
    %627 = vmatprep.mubr.bf16.mxu0 0
    %628 = vmatmul.mubr.bf16.gmra.mrb[0].mxu0 %v522
    %v629 = vpop.f32.mrb[0].mxu0
    %v630 = vadd.f32 %v545, %v629
    %v631 = vpop.f32.mrb[0].mxu0
    %v632 = vpop.f32.mrb[0].mxu0
    %v633 = vadd.f32 %v545, %v632
    %v634 = vpop.f32.mrb[0].mxu0
    %635 = vmatprep.mubr.bf16.mxu0 0
    %636 = vmatmul.mubr.bf16.gmra.mrb[0].mxu0 %v523
    %v637 = vpop.f32.mrb[0].mxu0
    %v638 = vadd.f32 %v545, %v637
    %v639 = vpop.f32.mrb[0].mxu0
    %v640 = vpop.f32.mrb[0].mxu0
    %v641 = vadd.f32 %v545, %v640
    %v642 = vpop.f32.mrb[0].mxu0
    %643 = vdwg.mxu0
    %v644 = vmax.f32 %v630, 0.0
    %v645 = vmax.f32 %v633, 0.0
    %v646 = vmax.f32 %v638, 0.0
    %v647 = vmax.f32 %v641, 0.0
    %v648 = vpack.c.bf16 %v645, %v644
    %v649 = vpack.c.bf16 %v647, %v646
    %v650 = vld [vmem:[#allocation11] sm:$0xff]
    %v651 = vld [vmem:[#allocation11 + $0x8] sm:$0xff]
    %v652 = vld [vmem:[#allocation11 + $0x10] sm:$0xff]
    %v653 = vld [vmem:[#allocation11 + $0x18] sm:$0xff]
    %v654 = vld [vmem:[#allocation11 + $0x20] sm:$0xff]
    %v655 = vld [vmem:[#allocation11 + $0x28] sm:$0xff]
    %v656 = vld [vmem:[#allocation11 + $0x30] sm:$0xff]
    %v657 = vld [vmem:[#allocation11 + $0x38] sm:$0xff]
    %v658 = vld [vmem:[#allocation11 + $0x40] sm:$0xff]
    %v659 = vld [vmem:[#allocation11 + $0x48] sm:$0xff]
    %v660 = vld [vmem:[#allocation11 + $0x50] sm:$0xff]
    %v661 = vld [vmem:[#allocation11 + $0x58] sm:$0xff]
    %v662 = vld [vmem:[#allocation11 + $0x60] sm:$0xff]
    %v663 = vld [vmem:[#allocation11 + $0x68] sm:$0xff]
    %v664 = vld [vmem:[#allocation11 + $0x70] sm:$0xff]
    %v665 = vld [vmem:[#allocation11 + $0x78] sm:$0xff]
    %v666 = vld [vmem:[%s9] sm:$0x3]
    %v668 = vlaneseq
    %v669 = vshrl.u32 %v668, 7
    %v670 = vsub.s32 0, %v669
    %v671 = vrot.slane %v666, %v670
    %v672 = vlaneseq
    %v673 = vshrl.u32 %v672, 7
    %v674 = vsub.s32 1, %v673
    %v675 = vrot.slane %v666, %v674
    %v694 = vunpack.c.l.b16 %v650
    %v695 = vunpack.c.h.b16 %v650
    %v696 = vunpack.c.l.b16 %v651
    %v697 = vunpack.c.h.b16 %v651
    %v698 = vunpack.c.l.b16 %v652
    %v699 = vunpack.c.h.b16 %v652
    %v700 = vunpack.c.l.b16 %v653
    %v701 = vunpack.c.h.b16 %v653
    %v702 = vunpack.c.l.b16 %v654
    %v703 = vunpack.c.h.b16 %v654
    %v704 = vunpack.c.l.b16 %v655
    %v705 = vunpack.c.h.b16 %v655
    %v706 = vunpack.c.l.b16 %v656
    %v707 = vunpack.c.h.b16 %v656
    %v708 = vunpack.c.l.b16 %v657
    %v709 = vunpack.c.h.b16 %v657
    %v710 = vunpack.c.l.b16 %v658
    %v711 = vunpack.c.h.b16 %v658
    %v712 = vunpack.c.l.b16 %v659
    %v713 = vunpack.c.h.b16 %v659
    %v714 = vunpack.c.l.b16 %v660
    %v715 = vunpack.c.h.b16 %v660
    %v716 = vunpack.c.l.b16 %v661
    %v717 = vunpack.c.h.b16 %v661
    %v718 = vunpack.c.l.b16 %v662
    %v719 = vunpack.c.h.b16 %v662
    %v720 = vunpack.c.l.b16 %v663
    %v721 = vunpack.c.h.b16 %v663
    %v722 = vunpack.c.l.b16 %v664
    %v723 = vunpack.c.h.b16 %v664
    %v724 = vunpack.c.l.b16 %v665
    %v725 = vunpack.c.h.b16 %v665
    %v726 = vpack.c.b16 %v696, %v694
    %v727 = vpack.c.b16 %v697, %v695
    %v728 = vpack.c.b16 %v700, %v698
    %v729 = vpack.c.b16 %v701, %v699
    %v730 = vpack.c.b16 %v704, %v702
    %v731 = vpack.c.b16 %v705, %v703
    %v732 = vpack.c.b16 %v708, %v706
    %v733 = vpack.c.b16 %v709, %v707
    %v734 = vpack.c.b16 %v712, %v710
    %v735 = vpack.c.b16 %v713, %v711
    %v736 = vpack.c.b16 %v716, %v714
    %v737 = vpack.c.b16 %v717, %v715
    %v738 = vpack.c.b16 %v720, %v718
    %v739 = vpack.c.b16 %v721, %v719
    %v740 = vpack.c.b16 %v724, %v722
    %v741 = vpack.c.b16 %v725, %v723
    %758 = vmatprep.subr.bf16.mxu0 %v727
    %759 = vmatpush1.bf16.msra.mxu0 %v726
    %760 = vmatprep.subr.bf16.mxu0 %v729
    %761 = vmatpush1.bf16.msra.mxu0 %v728
    %762 = vmatprep.subr.bf16.mxu0 %v731
    %763 = vmatpush1.bf16.msra.mxu0 %v730
    %764 = vmatprep.subr.bf16.mxu0 %v733
    %765 = vmatpush1.bf16.msra.mxu0 %v732
    %766 = vmatprep.subr.bf16.mxu0 %v735
    %767 = vmatpush1.bf16.msra.mxu0 %v734
    %768 = vmatprep.subr.bf16.mxu0 %v737
    %769 = vmatpush1.bf16.msra.mxu0 %v736
    %770 = vmatprep.subr.bf16.mxu0 %v739
    %771 = vmatpush1.bf16.msra.mxu0 %v738
    %772 = vmatprep.subr.bf16.mxu0 %v741
    %773 = vmatpush1.bf16.msra.mxu0 %v740
    %774 = vmatprep.subr.bf16.mxu0 0
    %775 = vmatpush1.bf16.msra.mxu0 0
    %776 = vmatprep.subr.bf16.mxu0 0
    %777 = vmatpush1.bf16.msra.mxu0 0
    %778 = vmatprep.subr.bf16.mxu0 0
    %779 = vmatpush1.bf16.msra.mxu0 0
    %780 = vmatprep.subr.bf16.mxu0 0
    %781 = vmatpush1.bf16.msra.mxu0 0
    %782 = vmatprep.subr.bf16.mxu0 0
    %783 = vmatpush1.bf16.msra.mxu0 0
    %784 = vmatprep.subr.bf16.mxu0 0
    %785 = vmatpush1.bf16.msra.mxu0 0
    %786 = vmatprep.subr.bf16.mxu0 0
    %787 = vmatpush1.bf16.msra.mxu0 0
    %788 = vmatprep.subr.bf16.mxu0 0
    %789 = vmatpush1.bf16.msra.mxu0 0
    %790 = vmatprep.mubr.bf16.mxu0 0
    %791 = vmatmul.mubr.bf16.gmra.mrb[0].mxu0 %v648
    %v792 = vpop.f32.mrb[0].mxu0
    %v793 = vadd.f32 %v671, %v792
    %v794 = vpop.f32.mrb[0].mxu0
    %v795 = vadd.f32 %v675, %v794
    %v796 = vpop.f32.mrb[0].mxu0
    %v797 = vadd.f32 %v671, %v796
    %v798 = vpop.f32.mrb[0].mxu0
    %v799 = vadd.f32 %v675, %v798
    %800 = vmatprep.mubr.bf16.mxu0 0
    %801 = vmatmul.mubr.bf16.gmra.mrb[0].mxu0 %v649
    %v802 = vpop.f32.mrb[0].mxu0
    %v803 = vadd.f32 %v671, %v802
    %v804 = vpop.f32.mrb[0].mxu0
    %v805 = vadd.f32 %v675, %v804
    %v806 = vpop.f32.mrb[0].mxu0
    %v807 = vadd.f32 %v671, %v806
    %v808 = vpop.f32.mrb[0].mxu0
    %v809 = vadd.f32 %v675, %v808
    %810 = vdwg.mxu0
    %v811 = vmul.f32 %v123, %v793
    %v812 = vmul.f32 %v124, %v795
    %v813 = vmul.f32 %v125, %v797
    %v814 = vmul.f32 %v126, %v799
    %v815 = vmul.f32 %v127, %v803
    %v816 = vmul.f32 %v128, %v805
    %v817 = vmul.f32 %v129, %v807
    %v818 = vmul.f32 %v130, %v809
    %v819 = vmax.f32 %v793, 0.0
    %v820 = vmax.f32 %v795, 0.0
    %v821 = vmax.f32 %v797, 0.0
    %v822 = vmax.f32 %v799, 0.0
    %v823 = vmax.f32 %v803, 0.0
    %v824 = vmax.f32 %v805, 0.0
    %v825 = vmax.f32 %v807, 0.0
    %v826 = vmax.f32 %v809, 0.0
    %vm827 = vcmp.ne.f32.partialorder %v793, %v793
    %vm828 = vcmp.ne.f32.partialorder %v795, %v795
    %vm829 = vcmp.ne.f32.partialorder %v797, %v797
    %vm830 = vcmp.ne.f32.partialorder %v799, %v799
    %vm831 = vcmp.ne.f32.partialorder %v803, %v803
    %vm832 = vcmp.ne.f32.partialorder %v805, %v805
    %vm833 = vcmp.ne.f32.partialorder %v807, %v807
    %vm834 = vcmp.ne.f32.partialorder %v809, %v809
    %v835 = vadd.f32 %v793, 0.0
    %v836 = vadd.f32 %v795, 0.0
    %v837 = vadd.f32 %v797, 0.0
    %v838 = vadd.f32 %v799, 0.0
    %v839 = vadd.f32 %v803, 0.0
    %v840 = vadd.f32 %v805, 0.0
    %v841 = vadd.f32 %v807, 0.0
    %v842 = vadd.f32 %v809, 0.0
    %v843 = vand.u32 2147483647, %v793
    %v844 = vand.u32 2147483647, %v795
    %v845 = vand.u32 2147483647, %v797
    %v846 = vand.u32 2147483647, %v799
    %v847 = vand.u32 2147483647, %v803
    %v848 = vand.u32 2147483647, %v805
    %v849 = vand.u32 2147483647, %v807
    %v850 = vand.u32 2147483647, %v809
    %v851 = vsub.f32 0.0, %v843
    %v852 = vsub.f32 0.0, %v844
    %v853 = vsub.f32 0.0, %v845
    %v854 = vsub.f32 0.0, %v846
    %v855 = vsub.f32 0.0, %v847
    %v856 = vsub.f32 0.0, %v848
    %v857 = vsub.f32 0.0, %v849
    %v858 = vsub.f32 0.0, %v850
    %v859 = vmul.f32 %v851, 1.442695
    %v860 = vpow.pop %v859
    %v861 = vmul.f32 %v852, 1.442695
    %v862 = vpow.pop %v861
    %v863 = vmul.f32 %v853, 1.442695
    %v864 = vpow.pop %v863
    %v865 = vmul.f32 %v854, 1.442695
    %v866 = vpow.pop %v865
    %v867 = vmul.f32 %v855, 1.442695
    %v868 = vpow.pop %v867
    %v869 = vmul.f32 %v856, 1.442695
    %v870 = vpow.pop %v869
    %v871 = vmul.f32 %v857, 1.442695
    %v872 = vpow.pop %v871
    %v873 = vmul.f32 %v858, 1.442695
    %v874 = vpow.pop %v873
    %v875 = vadd.f32 %v860, 1.0
    %v876 = vlog2.pop %v875
    %v877 = vmul.f32 %v876, 0.6931472
    %v878 = vmul.f32 -0.5, %v860
    %v879 = vadd.f32 %v878, 1.0
    %v880 = vmul.f32 %v879, %v860
    %v881 = vand.u32 2147483647, %v860
    %vm882 = vcmp.lt.f32.partialorder %v881, 0.0004427343
    %v883 = vsel %vm882, %v880, %v877
    %v884 = vadd.f32 %v862, 1.0
    %v885 = vlog2.pop %v884
    %v886 = vmul.f32 %v885, 0.6931472
    %v887 = vmul.f32 -0.5, %v862
    %v888 = vadd.f32 %v887, 1.0
    %v889 = vmul.f32 %v888, %v862
    %v890 = vand.u32 2147483647, %v862
    %vm891 = vcmp.lt.f32.partialorder %v890, 0.0004427343
    %v892 = vsel %vm891, %v889, %v886
    %v893 = vadd.f32 %v864, 1.0
    %v894 = vlog2.pop %v893
    %v895 = vmul.f32 %v894, 0.6931472
    %v896 = vmul.f32 -0.5, %v864
    %v897 = vadd.f32 %v896, 1.0
    %v898 = vmul.f32 %v897, %v864
    %v899 = vand.u32 2147483647, %v864
    %vm900 = vcmp.lt.f32.partialorder %v899, 0.0004427343
    %v901 = vsel %vm900, %v898, %v895
    %v902 = vadd.f32 %v866, 1.0
    %v903 = vlog2.pop %v902
    %v904 = vmul.f32 %v903, 0.6931472
    %v905 = vmul.f32 -0.5, %v866
    %v906 = vadd.f32 %v905, 1.0
    %v907 = vmul.f32 %v906, %v866
    %v908 = vand.u32 2147483647, %v866
    %vm909 = vcmp.lt.f32.partialorder %v908, 0.0004427343
    %v910 = vsel %vm909, %v907, %v904
    %v911 = vadd.f32 %v868, 1.0
    %v912 = vlog2.pop %v911
    %v913 = vmul.f32 %v912, 0.6931472
    %v914 = vmul.f32 -0.5, %v868
    %v915 = vadd.f32 %v914, 1.0
    %v916 = vmul.f32 %v915, %v868
    %v917 = vand.u32 2147483647, %v868
    %vm918 = vcmp.lt.f32.partialorder %v917, 0.0004427343
    %v919 = vsel %vm918, %v916, %v913
    %v920 = vadd.f32 %v870, 1.0
    %v921 = vlog2.pop %v920
    %v922 = vmul.f32 %v921, 0.6931472
    %v923 = vmul.f32 -0.5, %v870
    %v924 = vadd.f32 %v923, 1.0
    %v925 = vmul.f32 %v924, %v870
    %v926 = vand.u32 2147483647, %v870
    %vm927 = vcmp.lt.f32.partialorder %v926, 0.0004427343
    %v928 = vsel %vm927, %v925, %v922
    %v929 = vadd.f32 %v872, 1.0
    %v930 = vlog2.pop %v929
    %v931 = vmul.f32 %v930, 0.6931472
    %v932 = vmul.f32 -0.5, %v872
    %v933 = vadd.f32 %v932, 1.0
    %v934 = vmul.f32 %v933, %v872
    %v935 = vand.u32 2147483647, %v872
    %vm936 = vcmp.lt.f32.partialorder %v935, 0.0004427343
    %v937 = vsel %vm936, %v934, %v931
    %v938 = vadd.f32 %v874, 1.0
    %v939 = vlog2.pop %v938
    %v940 = vmul.f32 %v939, 0.6931472
    %v941 = vmul.f32 -0.5, %v874
    %v942 = vadd.f32 %v941, 1.0
    %v943 = vmul.f32 %v942, %v874
    %v944 = vand.u32 2147483647, %v874
    %vm945 = vcmp.lt.f32.partialorder %v944, 0.0004427343
    %v946 = vsel %vm945, %v943, %v940
    %v947 = vadd.f32 %v819, %v883
    %v948 = vadd.f32 %v820, %v892
    %v949 = vadd.f32 %v821, %v901
    %v950 = vadd.f32 %v822, %v910
    %v951 = vadd.f32 %v823, %v919
    %v952 = vadd.f32 %v824, %v928
    %v953 = vadd.f32 %v825, %v937
    %v954 = vadd.f32 %v826, %v946
    %v955 = vsel %vm827, %v835, %v947
    %v956 = vsel %vm828, %v836, %v948
    %v957 = vsel %vm829, %v837, %v949
    %v958 = vsel %vm830, %v838, %v950
    %v959 = vsel %vm831, %v839, %v951
    %v960 = vsel %vm832, %v840, %v952
    %v961 = vsel %vm833, %v841, %v953
    %v962 = vsel %vm834, %v842, %v954
    %v963 = vsub.f32 %v811, %v955
    %v964 = vsub.f32 %v812, %v956
    %v965 = vsub.f32 %v813, %v957
    %v966 = vsub.f32 %v814, %v958
    %v967 = vsub.f32 %v815, %v959
    %v968 = vsub.f32 %v816, %v960
    %v969 = vsub.f32 %v817, %v961
    %v970 = vsub.f32 %v818, %v962
    %v971 = vadd.f32 %v963, %v964
    %972 = vadd.xlane.f32.xlu0 %v971
    %v973 = vpop.xlane.xlu0 %972
    %v974 = vadd.f32 %v965, %v966
    %975 = vadd.xlane.f32.xlu0 %v974
    %v976 = vpop.xlane.xlu0 %975
    %v977 = vadd.f32 %v967, %v968
    %978 = vadd.xlane.f32.xlu0 %v977
    %v979 = vpop.xlane.xlu0 %978
    %v980 = vadd.f32 %v969, %v970
    %981 = vadd.xlane.f32.xlu0 %v980
    %v982 = vpop.xlane.xlu0 %981
    %v983 = vmul.f32 %v507, %v507
    %v984 = vmul.f32 %v509, %v509
    %v985 = vmul.f32 %v511, %v511
    %v986 = vmul.f32 %v513, %v513
    %v987 = vmul.f32 %v488, %v488
    %v988 = vmul.f32 %v492, %v492
    %v989 = vmul.f32 %v498, %v498
    %v990 = vmul.f32 %v502, %v502
    %v991 = vadd.f32 %v983, %v987
    %v992 = vadd.f32 %v984, %v988
    %v993 = vadd.f32 %v985, %v989
    %v994 = vadd.f32 %v986, %v990
    %v995 = vsub.f32 %v991, 1.0
    %v996 = vsub.f32 %v992, 1.0
    %v997 = vsub.f32 %v993, 1.0
    %v998 = vsub.f32 %v994, 1.0
    %v999 = vmul.f32 %v995, 0.5
    %v1000 = vmul.f32 %v996, 0.5
    %v1001 = vmul.f32 %v997, 0.5
    %v1002 = vmul.f32 %v998, 0.5
    %v1003 = vsub.f32 %v999, %v490
    %v1004 = vsub.f32 %v1000, %v494
    %v1005 = vsub.f32 %v1001, %v500
    %v1006 = vsub.f32 %v1002, %v504
    %1007 = vadd.xlane.f32.xlu0 %v1003
    %v1008 = vpop.xlane.xlu0 %1007
    %1009 = vadd.xlane.f32.xlu0 %v1004
    %v1010 = vpop.xlane.xlu0 %1009
    %1011 = vadd.xlane.f32.xlu0 %v1005
    %v1012 = vpop.xlane.xlu0 %1011
    %1013 = vadd.xlane.f32.xlu0 %v1006
    %v1014 = vpop.xlane.xlu0 %1013
    %v1015 = vsub.f32 %v973, %v1008
    %v1016 = vsub.f32 %v976, %v1010
    %v1017 = vsub.f32 %v979, %v1012
    %v1018 = vsub.f32 %v982, %v1014
    %vm1019 = vcmask 7168
    %v1020 = vsel %vm1019, %v1015, 0.0
    %v1021 = vsel %vm1019, %v1016, 0.0
    %v1022 = vadd.f32 %v1020, %v1021
    %v1023 = vsel %vm1019, %v1017, 0.0
    %v1024 = vadd.f32 %v1022, %v1023
    %v1025 = vsel %vm1019, %v1018, 0.0
    %v1026 = vadd.f32 %v1024, %v1025
    %1027 = vadd.xlane.f32.xlu0 %v1026
    %v1028 = vpop.xlane.xlu0 %1027
    %v1029 = vrot.slane %v1028, 4
    %v1030 = vadd.f32 %v1028, %v1029
    %v1031 = vrot.slane %v1030, 2
    %v1032 = vadd.f32 %v1030, %v1031
    %v1033 = vrot.slane %v1032, 1
    %v1034 = vadd.f32 %v1032, %v1033
    %s1035 = vtos %v1034
    %v1036 = vstv %s1035
    %1037 = vst [vmem:[#allocation13] sm:$0xff] %v1036
    // Predicated region
    $region66: #{tpu_custom_call.1} parent=1 // pred_check
      _
    $region67: #{tpu_custom_call.1} parent=1 // pred_check_branch
      %1039 = sbr.rel (0) target = $region69
    $region68: #{tpu_custom_call.1} parent=1 // pred_region
      %s1041 = ssub.s32 128, 128
      %1042 = vsyncadd [#allocation4], %s1041
      %s1044 = sshll.u32 [#allocation13], 4
      %s1045 = int_to_ptr.vmem [resolvable:$true] %s1044
      %1047 = dma.vmem_to_hbm [thread:$0]  %s1045, 128, %s10, [#allocation4]
    $region69: #{tpu_custom_call.1} parent=1 // pred_fallthru
      _
    // Predicated region
    $region70: #{tpu_custom_call.1} parent=1 // pred_check
      _
    $region71: #{tpu_custom_call.1} parent=1 // pred_check_branch
      %1049 = sbr.rel (0) target = $region73
    $region72: #{tpu_custom_call.1} parent=1 // pred_region
      %1050 = dma.done [#allocation4], 128
    $region73: #{tpu_custom_call.1} parent=1 // pred_fallthru
      _
    %1051 = vsyncpa [#allocation3], 1
    %1052 = vsyncpa [#allocation6], 1
    %1053 = vsyncpa [#allocation9], 1
    %1054 = vsyncpa [#allocation12], 1
    %1055 = vsyncpa [#allocation4], 1

// kernel: tpu_custom_call.1
$region0: #{tpu_custom_call.1}
  #allocation0 [shape = 'u32[]', space=smem, size = 0x4, offset = 0x4, fixed_abs, tag = 'smem constant byte address 0x4 - core index']
  #allocation1 [shape = 'u32[144,128]{1,0:T(1,128)}', space=vmem, size = 0x12000, scoped, tag = 'internal scratch']
  %s0 = inlined_call_operand.hbm [shape: bf16[32,256], index: 0, kind: input, shape index: {}]
  %s1 = inlined_call_operand.hbm [shape: f32[32,128], index: 1, kind: input, shape index: {}]
  %s2 = inlined_call_operand.hbm [shape: bf16[256,128], index: 2, kind: input, shape index: {}]
  %s3 = inlined_call_operand.vmem [shape: f32[1,128], index: 3, kind: input, shape index: {}]
  %s4 = inlined_call_operand.hbm [shape: bf16[128,256], index: 4, kind: input, shape index: {}]
  %s5 = inlined_call_operand.vmem [shape: f32[1,256], index: 5, kind: input, shape index: {}]
  %s6 = inlined_call_operand.hbm [shape: bf16[128,128], index: 6, kind: input, shape index: {}]
  %s7 = inlined_call_operand.vmem [shape: f32[1,128], index: 7, kind: input, shape index: {}]
  %s8 = inlined_call_operand.hbm [shape: bf16[128,256], index: 8, kind: input, shape index: {}]
  %s9 = inlined_call_operand.vmem [shape: f32[1,256], index: 9, kind: input, shape index: {}]
  %s10 = inlined_call_operand.hbm [shape: f32[1,8,128], index: 10, kind: output, shape index: {}]
  %s11 = sld [smem:[#allocation0]]
  $region74: #{tpu_custom_call.1} parent=0
    _
  %s13 = ssub.s32 1, %s11
  %s14 = scalar_select 0, %s13, %s11
  $region1: #{tpu_custom_call.1} parent=0
    #allocation2 [shape = 'u8[16384]{0}', space=vmem, size = 0x4000, scoped, tag = 'input window, operand 0, single buffered']
    #allocation3 [shape = 's32[1]{0}', space=sflag, size = 0x4, scoped, tag = 'scoped memory for tpu_custom_call.1']
    #allocation4 [shape = 's32[1]{0}', space=sflag, size = 0x4, scoped, tag = 'scoped memory for tpu_custom_call.1']
    #allocation5 [shape = 'u8[16384]{0}', space=vmem, size = 0x4000, scoped, tag = 'input window, operand 1, single buffered']
    #allocation6 [shape = 's32[1]{0}', space=sflag, size = 0x4, scoped, tag = 'scoped memory for tpu_custom_call.1']
    #allocation7 [shape = 'u8[65536]{0}', space=vmem, size = 0x10000, scoped, tag = 'input window, operand 2, single buffered']
    #allocation8 [shape = 'u8[65536]{0}', space=vmem, size = 0x10000, scoped, tag = 'input window, operand 4, single buffered']
    #allocation9 [shape = 's32[1]{0}', space=sflag, size = 0x4, scoped, tag = 'scoped memory for tpu_custom_call.1']
    #allocation10 [shape = 'u8[32768]{0}', space=vmem, size = 0x8000, scoped, tag = 'input window, operand 6, single buffered']
    #allocation11 [shape = 'u8[65536]{0}', space=vmem, size = 0x10000, scoped, tag = 'input window, operand 8, single buffered']
    #allocation12 [shape = 's32[1]{0}', space=sflag, size = 0x4, scoped, tag = 'scoped memory for tpu_custom_call.1']
    #allocation13 [shape = 'u8[4096]{0}', space=vmem, size = 0x1000, scoped, tag = 'output window, operand 0, single buffered']
    %15 = vsyncpa [#allocation3], 0
    %16 = vsyncpa [#allocation6], 0
    %17 = vsyncpa [#allocation9], 0
    %18 = vsyncpa [#allocation12], 0
    %19 = vsyncpa [#allocation4], 0
    // Predicated region
    $region2: #{tpu_custom_call.1} parent=1 // pred_check
      _
    $region3: #{tpu_custom_call.1} parent=1 // pred_check_branch
      %21 = sbr.rel (0) target = $region5
    $region4: #{tpu_custom_call.1} parent=1 // pred_region
      %s23 = ssub.s32 512, 512
      %24 = vsyncadd [#allocation3], %s23
      %s25 = sshll.u32 [#allocation2], 4
      %s26 = int_to_ptr.vmem [resolvable:$true] %s25
      %31 = dma.hbm_to_vmem [thread:$0]  %s0, 512, %s26, [#allocation3], 128, 128, 8
    $region5: #{tpu_custom_call.1} parent=1 // pred_fallthru
      _
    // Predicated region
    $region6: #{tpu_custom_call.1} parent=1 // pred_check
      _
    $region7: #{tpu_custom_call.1} parent=1 // pred_check_branch
      %33 = sbr.rel (0) target = $region9
    $region8: #{tpu_custom_call.1} parent=1 // pred_region
      %s35 = ssub.s32 512, 512
      %36 = vsyncadd [#allocation6], %s35
      %s37 = sshll.u32 [#allocation5], 4
      %s38 = int_to_ptr.vmem [resolvable:$true] %s37
      %43 = dma.hbm_to_vmem [thread:$0]  %s1, 512, %s38, [#allocation6], 128, 128, 8
    $region9: #{tpu_custom_call.1} parent=1 // pred_fallthru
      _
    // Predicated region
    $region10: #{tpu_custom_call.1} parent=1 // pred_check
      _
    $region11: #{tpu_custom_call.1} parent=1 // pred_check_branch
      %45 = sbr.rel (0) target = $region13
    $region12: #{tpu_custom_call.1} parent=1 // pred_region
      %s47 = ssub.s32 2048, 2048
      %48 = vsyncadd [#allocation6], %s47
      %s49 = sshll.u32 [#allocation7], 4
      %s50 = int_to_ptr.vmem [resolvable:$true] %s49
      %55 = dma.hbm_to_vmem [thread:$0]  %s2, 2048, %s50, [#allocation6], 64, 64, 4
    $region13: #{tpu_custom_call.1} parent=1 // pred_fallthru
      _
    // Predicated region
    $region14: #{tpu_custom_call.1} parent=1 // pred_check
      _
    $region15: #{tpu_custom_call.1} parent=1 // pred_check_branch
      %57 = sbr.rel (0) target = $region17
    $region16: #{tpu_custom_call.1} parent=1 // pred_region
      _
    $region17: #{tpu_custom_call.1} parent=1 // pred_fallthru
      _
    // Predicated region
    $region18: #{tpu_custom_call.1} parent=1 // pred_check
      _
    $region19: #{tpu_custom_call.1} parent=1 // pred_check_branch
      %59 = sbr.rel (0) target = $region21
    $region20: #{tpu_custom_call.1} parent=1 // pred_region
      %s61 = ssub.s32 2048, 2048
      %62 = vsyncadd [#allocation9], %s61
      %s63 = sshll.u32 [#allocation8], 4
      %s64 = int_to_ptr.vmem [resolvable:$true] %s63
      %69 = dma.hbm_to_vmem [thread:$0]  %s4, 2048, %s64, [#allocation9], 128, 128, 8
    $region21: #{tpu_custom_call.1} parent=1 // pred_fallthru
      _
    // Predicated region
    $region22: #{tpu_custom_call.1} parent=1 // pred_check
      _
    $region23: #{tpu_custom_call.1} parent=1 // pred_check_branch
      %71 = sbr.rel (0) target = $region25
    $region24: #{tpu_custom_call.1} parent=1 // pred_region
      _
    $region25: #{tpu_custom_call.1} parent=1 // pred_fallthru
      _
    // Predicated region
    $region26: #{tpu_custom_call.1} parent=1 // pred_check
      _
    $region27: #{tpu_custom_call.1} parent=1 // pred_check_branch
      %73 = sbr.rel (0) target = $region29
    $region28: #{tpu_custom_call.1} parent=1 // pred_region
      %s75 = ssub.s32 1024, 1024
      %76 = vsyncadd [#allocation9], %s75
      %s77 = sshll.u32 [#allocation10], 4
      %s78 = int_to_ptr.vmem [resolvable:$true] %s77
      %83 = dma.hbm_to_vmem [thread:$0]  %s6, 1024, %s78, [#allocation9], 64, 64, 4
    $region29: #{tpu_custom_call.1} parent=1 // pred_fallthru
      _
    // Predicated region
    $region30: #{tpu_custom_call.1} parent=1 // pred_check
      _
    $region31: #{tpu_custom_call.1} parent=1 // pred_check_branch
      %85 = sbr.rel (0) target = $region33
    $region32: #{tpu_custom_call.1} parent=1 // pred_region
      _
    $region33: #{tpu_custom_call.1} parent=1 // pred_fallthru
      _
    // Predicated region
    $region34: #{tpu_custom_call.1} parent=1 // pred_check
      _
    $region35: #{tpu_custom_call.1} parent=1 // pred_check_branch
      %87 = sbr.rel (0) target = $region37
    $region36: #{tpu_custom_call.1} parent=1 // pred_region
      %s89 = ssub.s32 2048, 2048
      %90 = vsyncadd [#allocation12], %s89
      %s91 = sshll.u32 [#allocation11], 4
      %s92 = int_to_ptr.vmem [resolvable:$true] %s91
      %97 = dma.hbm_to_vmem [thread:$0]  %s8, 2048, %s92, [#allocation12], 128, 128, 8
    $region37: #{tpu_custom_call.1} parent=1 // pred_fallthru
      _
    // Predicated region
    $region38: #{tpu_custom_call.1} parent=1 // pred_check
      _
    $region39: #{tpu_custom_call.1} parent=1 // pred_check_branch
      %99 = sbr.rel (0) target = $region41
    $region40: #{tpu_custom_call.1} parent=1 // pred_region
      _
    $region41: #{tpu_custom_call.1} parent=1 // pred_fallthru
      _
    // Predicated region
    $region42: #{tpu_custom_call.1} parent=1 // pred_check
      _
    $region43: #{tpu_custom_call.1} parent=1 // pred_check_branch
      %101 = sbr.rel (0) target = $region45
    $region44: #{tpu_custom_call.1} parent=1 // pred_region
      %102 = dma.done [#allocation3], 512
    $region45: #{tpu_custom_call.1} parent=1 // pred_fallthru
      _
    // Predicated region
    $region46: #{tpu_custom_call.1} parent=1 // pred_check
      _
    $region47: #{tpu_custom_call.1} parent=1 // pred_check_branch
      %104 = sbr.rel (0) target = $region49
    $region48: #{tpu_custom_call.1} parent=1 // pred_region
      %105 = dma.done [#allocation6], 512
    $region49: #{tpu_custom_call.1} parent=1 // pred_fallthru
      _
    // Predicated region
    $region50: #{tpu_custom_call.1} parent=1 // pred_check
      _
    $region51: #{tpu_custom_call.1} parent=1 // pred_check_branch
      %107 = sbr.rel (0) target = $region53
    $region52: #{tpu_custom_call.1} parent=1 // pred_region
      %108 = dma.done [#allocation6], 2048
    $region53: #{tpu_custom_call.1} parent=1 // pred_fallthru
      _
    // Predicated region
    $region54: #{tpu_custom_call.1} parent=1 // pred_check
      _
    $region55: #{tpu_custom_call.1} parent=1 // pred_check_branch
      %110 = sbr.rel (0) target = $region57
    $region56: #{tpu_custom_call.1} parent=1 // pred_region
      %111 = dma.done [#allocation9], 2048
    $region57: #{tpu_custom_call.1} parent=1 // pred_fallthru
      _
    // Predicated region
    $region58: #{tpu_custom_call.1} parent=1 // pred_check
      _
    $region59: #{tpu_custom_call.1} parent=1 // pred_check_branch
      %113 = sbr.rel (0) target = $region61
    $region60: #{tpu_custom_call.1} parent=1 // pred_region
      %114 = dma.done [#allocation9], 1024
    $region61: #{tpu_custom_call.1} parent=1 // pred_fallthru
      _
    // Predicated region
    $region62: #{tpu_custom_call.1} parent=1 // pred_check
      _
    $region63: #{tpu_custom_call.1} parent=1 // pred_check_branch
      %116 = sbr.rel (0) target = $region65
    $region64: #{tpu_custom_call.1} parent=1 // pred_region
      %117 = dma.done [#allocation12], 2048
    $region65: #{tpu_custom_call.1} parent=1 // pred_fallthru
      _
    %v119 = vld [vmem:[#allocation2] sm:$0xff]
    %v120 = vld [vmem:[#allocation2 + $0x8] sm:$0xff]
    %v121 = vld [vmem:[#allocation2 + $0x10] sm:$0xff]
    %v122 = vld [vmem:[#allocation2 + $0x18] sm:$0xff]
    %v123 = vunpack.c.l.bf16 %v119
    %v124 = vunpack.c.h.bf16 %v119
    %v125 = vunpack.c.l.bf16 %v120
    %v126 = vunpack.c.h.bf16 %v120
    %v127 = vunpack.c.l.bf16 %v121
    %v128 = vunpack.c.h.bf16 %v121
    %v129 = vunpack.c.l.bf16 %v122
    %v130 = vunpack.c.h.bf16 %v122
    %v131 = vld [vmem:[#allocation5] sm:$0xff]
    %v132 = vld [vmem:[#allocation5 + $0x8] sm:$0xff]
    %v133 = vld [vmem:[#allocation5 + $0x10] sm:$0xff]
    %v134 = vld [vmem:[#allocation5 + $0x18] sm:$0xff]
    %v135 = vld [vmem:[#allocation7] sm:$0xf]
    %v136 = vld [vmem:[#allocation7 + $0x4] sm:$0xf]
    %v137 = vld [vmem:[#allocation7 + $0x8] sm:$0xf]
    %v138 = vld [vmem:[#allocation7 + $0xc] sm:$0xf]
    %v139 = vld [vmem:[#allocation7 + $0x10] sm:$0xf]
    %v140 = vld [vmem:[#allocation7 + $0x14] sm:$0xf]
    %v141 = vld [vmem:[#allocation7 + $0x18] sm:$0xf]
    %v142 = vld [vmem:[#allocation7 + $0x1c] sm:$0xf]
    %v143 = vld [vmem:[#allocation7 + $0x20] sm:$0xf]
    %v144 = vld [vmem:[#allocation7 + $0x24] sm:$0xf]
    %v145 = vld [vmem:[#allocation7 + $0x28] sm:$0xf]
    %v146 = vld [vmem:[#allocation7 + $0x2c] sm:$0xf]
    %v147 = vld [vmem:[#allocation7 + $0x30] sm:$0xf]
    %v148 = vld [vmem:[#allocation7 + $0x34] sm:$0xf]
    %v149 = vld [vmem:[#allocation7 + $0x38] sm:$0xf]
    %v150 = vld [vmem:[#allocation7 + $0x3c] sm:$0xf]
    %v151 = vld [vmem:[#allocation7 + $0x40] sm:$0xf]
    %v152 = vld [vmem:[#allocation7 + $0x44] sm:$0xf]
    %v153 = vld [vmem:[#allocation7 + $0x48] sm:$0xf]
    %v154 = vld [vmem:[#allocation7 + $0x4c] sm:$0xf]
    %v155 = vld [vmem:[#allocation7 + $0x50] sm:$0xf]
    %v156 = vld [vmem:[#allocation7 + $0x54] sm:$0xf]
    %v157 = vld [vmem:[#allocation7 + $0x58] sm:$0xf]
    %v158 = vld [vmem:[#allocation7 + $0x5c] sm:$0xf]
    %v159 = vld [vmem:[#allocation7 + $0x60] sm:$0xf]
    %v160 = vld [vmem:[#allocation7 + $0x64] sm:$0xf]
    %v161 = vld [vmem:[#allocation7 + $0x68] sm:$0xf]
    %v162 = vld [vmem:[#allocation7 + $0x6c] sm:$0xf]
    %v163 = vld [vmem:[#allocation7 + $0x70] sm:$0xf]
    %v164 = vld [vmem:[#allocation7 + $0x74] sm:$0xf]
    %v165 = vld [vmem:[#allocation7 + $0x78] sm:$0xf]
    %v166 = vld [vmem:[#allocation7 + $0x7c] sm:$0xf]
    %v167 = vld [vmem:[%s3] sm:$0x1]
    %v169 = vlaneseq
    %v170 = vshrl.u32 %v169, 7
    %v171 = vsub.s32 0, %v170
    %v172 = vrot.slane %v167, %v171
    %v178 = vunpack.c.l.b16 %v119
    %v179 = vunpack.c.h.b16 %v119
    %v180 = vunpack.c.l.b16 %v120
    %v181 = vunpack.c.h.b16 %v120
    %v182 = vunpack.c.l.b16 %v121
    %v183 = vunpack.c.h.b16 %v121
    %v184 = vunpack.c.l.b16 %v122
    %v185 = vunpack.c.h.b16 %v122
    %v186 = vpack.c.b16 %v180, %v178
    %v187 = vpack.c.b16 %v181, %v179
    %v188 = vpack.c.b16 %v184, %v182
    %v189 = vpack.c.b16 %v185, %v183
    %v226 = vunpack.c.l.b16 %v135
    %v227 = vunpack.c.l.b16 %v136
    %v228 = vunpack.c.l.b16 %v137
    %v229 = vunpack.c.l.b16 %v138
    %v230 = vunpack.c.l.b16 %v139
    %v231 = vunpack.c.l.b16 %v140
    %v232 = vunpack.c.l.b16 %v141
    %v233 = vunpack.c.l.b16 %v142
    %v234 = vunpack.c.l.b16 %v143
    %v235 = vunpack.c.l.b16 %v144
    %v236 = vunpack.c.l.b16 %v145
    %v237 = vunpack.c.l.b16 %v146
    %v238 = vunpack.c.l.b16 %v147
    %v239 = vunpack.c.l.b16 %v148
    %v240 = vunpack.c.l.b16 %v149
    %v241 = vunpack.c.l.b16 %v150
    %v242 = vunpack.c.l.b16 %v151
    %v243 = vunpack.c.l.b16 %v152
    %v244 = vunpack.c.l.b16 %v153
    %v245 = vunpack.c.l.b16 %v154
    %v246 = vunpack.c.l.b16 %v155
    %v247 = vunpack.c.l.b16 %v156
    %v248 = vunpack.c.l.b16 %v157
    %v249 = vunpack.c.l.b16 %v158
    %v250 = vunpack.c.l.b16 %v159
    %v251 = vunpack.c.l.b16 %v160
    %v252 = vunpack.c.l.b16 %v161
    %v253 = vunpack.c.l.b16 %v162
    %v254 = vunpack.c.l.b16 %v163
    %v255 = vunpack.c.l.b16 %v164
    %v256 = vunpack.c.l.b16 %v165
    %v257 = vunpack.c.l.b16 %v166
    %v258 = vpack.c.b16 %v227, %v226
    %v259 = vpack.c.b16 %v229, %v228
    %v260 = vpack.c.b16 %v231, %v230
    %v261 = vpack.c.b16 %v233, %v232
    %v262 = vpack.c.b16 %v235, %v234
    %v263 = vpack.c.b16 %v237, %v236
    %v264 = vpack.c.b16 %v239, %v238
    %v265 = vpack.c.b16 %v241, %v240
    %v266 = vpack.c.b16 %v243, %v242
    %v267 = vpack.c.b16 %v245, %v244
    %v268 = vpack.c.b16 %v247, %v246
    %v269 = vpack.c.b16 %v249, %v248
    %v270 = vpack.c.b16 %v251, %v250
    %v271 = vpack.c.b16 %v253, %v252
    %v272 = vpack.c.b16 %v255, %v254
    %v273 = vpack.c.b16 %v257, %v256
    %290 = vmatprep.subr.bf16.mxu0 0
    %291 = vmatpush1.bf16.msra.mxu0 %v258
    %292 = vmatprep.subr.bf16.mxu0 0
    %293 = vmatpush1.bf16.msra.mxu0 %v259
    %294 = vmatprep.subr.bf16.mxu0 0
    %295 = vmatpush1.bf16.msra.mxu0 %v260
    %296 = vmatprep.subr.bf16.mxu0 0
    %297 = vmatpush1.bf16.msra.mxu0 %v261
    %298 = vmatprep.subr.bf16.mxu0 0
    %299 = vmatpush1.bf16.msra.mxu0 %v262
    %300 = vmatprep.subr.bf16.mxu0 0
    %301 = vmatpush1.bf16.msra.mxu0 %v263
    %302 = vmatprep.subr.bf16.mxu0 0
    %303 = vmatpush1.bf16.msra.mxu0 %v264
    %304 = vmatprep.subr.bf16.mxu0 0
    %305 = vmatpush1.bf16.msra.mxu0 %v265
    %306 = vmatprep.subr.bf16.mxu0 0
    %307 = vmatpush1.bf16.msra.mxu0 %v266
    %308 = vmatprep.subr.bf16.mxu0 0
    %309 = vmatpush1.bf16.msra.mxu0 %v267
    %310 = vmatprep.subr.bf16.mxu0 0
    %311 = vmatpush1.bf16.msra.mxu0 %v268
    %312 = vmatprep.subr.bf16.mxu0 0
    %313 = vmatpush1.bf16.msra.mxu0 %v269
    %314 = vmatprep.subr.bf16.mxu0 0
    %315 = vmatpush1.bf16.msra.mxu0 %v270
    %316 = vmatprep.subr.bf16.mxu0 0
    %317 = vmatpush1.bf16.msra.mxu0 %v271
    %318 = vmatprep.subr.bf16.mxu0 0
    %319 = vmatpush1.bf16.msra.mxu0 %v272
    %320 = vmatprep.subr.bf16.mxu0 0
    %321 = vmatpush1.bf16.msra.mxu0 %v273
    %322 = vmatprep.mubr.bf16.mxu0 %v187
    %323 = vmatmul.mubr.bf16.gmra.mrb[0].mxu0 %v186
    %v324 = vpop.f32.mrb[0].mxu0
    %v325 = vadd.f32 %v172, %v324
    %v326 = vpop.f32.mrb[0].mxu0
    %v327 = vpop.f32.mrb[0].mxu0
    %v328 = vadd.f32 %v172, %v327
    %v329 = vpop.f32.mrb[0].mxu0
    %330 = vmatprep.mubr.bf16.mxu0 %v189
    %331 = vmatmul.mubr.bf16.gmra.mrb[0].mxu0 %v188
    %v332 = vpop.f32.mrb[0].mxu0
    %v333 = vadd.f32 %v172, %v332
    %v334 = vpop.f32.mrb[0].mxu0
    %v335 = vpop.f32.mrb[0].mxu0
    %v336 = vadd.f32 %v172, %v335
    %v337 = vpop.f32.mrb[0].mxu0
    %338 = vdwg.mxu0
    %v339 = vmax.f32 %v325, 0.0
    %v340 = vmax.f32 %v328, 0.0
    %v341 = vmax.f32 %v333, 0.0
    %v342 = vmax.f32 %v336, 0.0
    %v343 = vpack.c.bf16 %v340, %v339
    %v344 = vpack.c.bf16 %v342, %v341
    %v345 = vld [vmem:[#allocation8] sm:$0xff]
    %v346 = vld [vmem:[#allocation8 + $0x8] sm:$0xff]
    %v347 = vld [vmem:[#allocation8 + $0x10] sm:$0xff]
    %v348 = vld [vmem:[#allocation8 + $0x18] sm:$0xff]
    %v349 = vld [vmem:[#allocation8 + $0x20] sm:$0xff]
    %v350 = vld [vmem:[#allocation8 + $0x28] sm:$0xff]
    %v351 = vld [vmem:[#allocation8 + $0x30] sm:$0xff]
    %v352 = vld [vmem:[#allocation8 + $0x38] sm:$0xff]
    %v353 = vld [vmem:[#allocation8 + $0x40] sm:$0xff]
    %v354 = vld [vmem:[#allocation8 + $0x48] sm:$0xff]
    %v355 = vld [vmem:[#allocation8 + $0x50] sm:$0xff]
    %v356 = vld [vmem:[#allocation8 + $0x58] sm:$0xff]
    %v357 = vld [vmem:[#allocation8 + $0x60] sm:$0xff]
    %v358 = vld [vmem:[#allocation8 + $0x68] sm:$0xff]
    %v359 = vld [vmem:[#allocation8 + $0x70] sm:$0xff]
    %v360 = vld [vmem:[#allocation8 + $0x78] sm:$0xff]
    %v361 = vld [vmem:[%s5] sm:$0x3]
    %v363 = vlaneseq
    %v364 = vshrl.u32 %v363, 7
    %v365 = vsub.s32 0, %v364
    %v366 = vrot.slane %v361, %v365
    %v367 = vlaneseq
    %v368 = vshrl.u32 %v367, 7
    %v369 = vsub.s32 1, %v368
    %v370 = vrot.slane %v361, %v369
    %v389 = vunpack.c.l.b16 %v345
    %v390 = vunpack.c.h.b16 %v345
    %v391 = vunpack.c.l.b16 %v346
    %v392 = vunpack.c.h.b16 %v346
    %v393 = vunpack.c.l.b16 %v347
    %v394 = vunpack.c.h.b16 %v347
    %v395 = vunpack.c.l.b16 %v348
    %v396 = vunpack.c.h.b16 %v348
    %v397 = vunpack.c.l.b16 %v349
    %v398 = vunpack.c.h.b16 %v349
    %v399 = vunpack.c.l.b16 %v350
    %v400 = vunpack.c.h.b16 %v350
    %v401 = vunpack.c.l.b16 %v351
    %v402 = vunpack.c.h.b16 %v351
    %v403 = vunpack.c.l.b16 %v352
    %v404 = vunpack.c.h.b16 %v352
    %v405 = vunpack.c.l.b16 %v353
    %v406 = vunpack.c.h.b16 %v353
    %v407 = vunpack.c.l.b16 %v354
    %v408 = vunpack.c.h.b16 %v354
    %v409 = vunpack.c.l.b16 %v355
    %v410 = vunpack.c.h.b16 %v355
    %v411 = vunpack.c.l.b16 %v356
    %v412 = vunpack.c.h.b16 %v356
    %v413 = vunpack.c.l.b16 %v357
    %v414 = vunpack.c.h.b16 %v357
    %v415 = vunpack.c.l.b16 %v358
    %v416 = vunpack.c.h.b16 %v358
    %v417 = vunpack.c.l.b16 %v359
    %v418 = vunpack.c.h.b16 %v359
    %v419 = vunpack.c.l.b16 %v360
    %v420 = vunpack.c.h.b16 %v360
    %v421 = vpack.c.b16 %v391, %v389
    %v422 = vpack.c.b16 %v392, %v390
    %v423 = vpack.c.b16 %v395, %v393
    %v424 = vpack.c.b16 %v396, %v394
    %v425 = vpack.c.b16 %v399, %v397
    %v426 = vpack.c.b16 %v400, %v398
    %v427 = vpack.c.b16 %v403, %v401
    %v428 = vpack.c.b16 %v404, %v402
    %v429 = vpack.c.b16 %v407, %v405
    %v430 = vpack.c.b16 %v408, %v406
    %v431 = vpack.c.b16 %v411, %v409
    %v432 = vpack.c.b16 %v412, %v410
    %v433 = vpack.c.b16 %v415, %v413
    %v434 = vpack.c.b16 %v416, %v414
    %v435 = vpack.c.b16 %v419, %v417
    %v436 = vpack.c.b16 %v420, %v418
    %453 = vmatprep.subr.bf16.mxu0 %v422
    %454 = vmatpush1.bf16.msra.mxu0 %v421
    %455 = vmatprep.subr.bf16.mxu0 %v424
    %456 = vmatpush1.bf16.msra.mxu0 %v423
    %457 = vmatprep.subr.bf16.mxu0 %v426
    %458 = vmatpush1.bf16.msra.mxu0 %v425
    %459 = vmatprep.subr.bf16.mxu0 %v428
    %460 = vmatpush1.bf16.msra.mxu0 %v427
    %461 = vmatprep.subr.bf16.mxu0 %v430
    %462 = vmatpush1.bf16.msra.mxu0 %v429
    %463 = vmatprep.subr.bf16.mxu0 %v432
    %464 = vmatpush1.bf16.msra.mxu0 %v431
    %465 = vmatprep.subr.bf16.mxu0 %v434
    %466 = vmatpush1.bf16.msra.mxu0 %v433
    %467 = vmatprep.subr.bf16.mxu0 %v436
    %468 = vmatpush1.bf16.msra.mxu0 %v435
    %469 = vmatprep.subr.bf16.mxu0 0
    %470 = vmatpush1.bf16.msra.mxu0 0
    %471 = vmatprep.subr.bf16.mxu0 0
    %472 = vmatpush1.bf16.msra.mxu0 0
    %473 = vmatprep.subr.bf16.mxu0 0
    %474 = vmatpush1.bf16.msra.mxu0 0
    %475 = vmatprep.subr.bf16.mxu0 0
    %476 = vmatpush1.bf16.msra.mxu0 0
    %477 = vmatprep.subr.bf16.mxu0 0
    %478 = vmatpush1.bf16.msra.mxu0 0
    %479 = vmatprep.subr.bf16.mxu0 0
    %480 = vmatpush1.bf16.msra.mxu0 0
    %481 = vmatprep.subr.bf16.mxu0 0
    %482 = vmatpush1.bf16.msra.mxu0 0
    %483 = vmatprep.subr.bf16.mxu0 0
    %484 = vmatpush1.bf16.msra.mxu0 0
    %485 = vmatprep.mubr.bf16.mxu0 0
    %486 = vmatmul.mubr.bf16.gmra.mrb[0].mxu0 %v343
    %v487 = vpop.f32.mrb[0].mxu0
    %v488 = vadd.f32 %v366, %v487
    %v489 = vpop.f32.mrb[0].mxu0
    %v490 = vadd.f32 %v370, %v489
    %v491 = vpop.f32.mrb[0].mxu0
    %v492 = vadd.f32 %v366, %v491
    %v493 = vpop.f32.mrb[0].mxu0
    %v494 = vadd.f32 %v370, %v493
    %495 = vmatprep.mubr.bf16.mxu0 0
    %496 = vmatmul.mubr.bf16.gmra.mrb[0].mxu0 %v344
    %v497 = vpop.f32.mrb[0].mxu0
    %v498 = vadd.f32 %v366, %v497
    %v499 = vpop.f32.mrb[0].mxu0
    %v500 = vadd.f32 %v370, %v499
    %v501 = vpop.f32.mrb[0].mxu0
    %v502 = vadd.f32 %v366, %v501
    %v503 = vpop.f32.mrb[0].mxu0
    %v504 = vadd.f32 %v370, %v503
    %505 = vdwg.mxu0
    %v506 = vmul.f32 %v490, 1.442695
    %v507 = vpow.pop %v506
    %v508 = vmul.f32 %v494, 1.442695
    %v509 = vpow.pop %v508
    %v510 = vmul.f32 %v500, 1.442695
    %v511 = vpow.pop %v510
    %v512 = vmul.f32 %v504, 1.442695
    %v513 = vpow.pop %v512
    %v514 = vmul.f32 %v507, %v131
    %v515 = vmul.f32 %v509, %v132
    %v516 = vmul.f32 %v511, %v133
    %v517 = vmul.f32 %v513, %v134
    %v518 = vadd.f32 %v488, %v514
    %v519 = vadd.f32 %v492, %v515
    %v520 = vadd.f32 %v498, %v516
    %v521 = vadd.f32 %v502, %v517
    %v522 = vpack.c.bf16 %v519, %v518
    %v523 = vpack.c.bf16 %v521, %v520
    %v524 = vld [vmem:[#allocation10] sm:$0xf]
    %v525 = vld [vmem:[#allocation10 + $0x4] sm:$0xf]
    %v526 = vld [vmem:[#allocation10 + $0x8] sm:$0xf]
    %v527 = vld [vmem:[#allocation10 + $0xc] sm:$0xf]
    %v528 = vld [vmem:[#allocation10 + $0x10] sm:$0xf]
    %v529 = vld [vmem:[#allocation10 + $0x14] sm:$0xf]
    %v530 = vld [vmem:[#allocation10 + $0x18] sm:$0xf]
    %v531 = vld [vmem:[#allocation10 + $0x1c] sm:$0xf]
    %v532 = vld [vmem:[#allocation10 + $0x20] sm:$0xf]
    %v533 = vld [vmem:[#allocation10 + $0x24] sm:$0xf]
    %v534 = vld [vmem:[#allocation10 + $0x28] sm:$0xf]
    %v535 = vld [vmem:[#allocation10 + $0x2c] sm:$0xf]
    %v536 = vld [vmem:[#allocation10 + $0x30] sm:$0xf]
    %v537 = vld [vmem:[#allocation10 + $0x34] sm:$0xf]
    %v538 = vld [vmem:[#allocation10 + $0x38] sm:$0xf]
    %v539 = vld [vmem:[#allocation10 + $0x3c] sm:$0xf]
    %v540 = vld [vmem:[%s7] sm:$0x1]
    %v542 = vlaneseq
    %v543 = vshrl.u32 %v542, 7
    %v544 = vsub.s32 0, %v543
    %v545 = vrot.slane %v540, %v544
    %v563 = vunpack.c.l.b16 %v524
    %v564 = vunpack.c.l.b16 %v525
    %v565 = vunpack.c.l.b16 %v526
    %v566 = vunpack.c.l.b16 %v527
    %v567 = vunpack.c.l.b16 %v528
    %v568 = vunpack.c.l.b16 %v529
    %v569 = vunpack.c.l.b16 %v530
    %v570 = vunpack.c.l.b16 %v531
    %v571 = vunpack.c.l.b16 %v532
    %v572 = vunpack.c.l.b16 %v533
    %v573 = vunpack.c.l.b16 %v534
    %v574 = vunpack.c.l.b16 %v535
    %v575 = vunpack.c.l.b16 %v536
    %v576 = vunpack.c.l.b16 %v537
    %v577 = vunpack.c.l.b16 %v538
    %v578 = vunpack.c.l.b16 %v539
    %v579 = vpack.c.b16 %v564, %v563
    %v580 = vpack.c.b16 %v566, %v565
    %v581 = vpack.c.b16 %v568, %v567
    %v582 = vpack.c.b16 %v570, %v569
    %v583 = vpack.c.b16 %v572, %v571
    %v584 = vpack.c.b16 %v574, %v573
    %v585 = vpack.c.b16 %v576, %v575
    %v586 = vpack.c.b16 %v578, %v577
    %595 = vmatprep.subr.bf16.mxu0 0
    %596 = vmatpush1.bf16.msra.mxu0 %v579
    %597 = vmatprep.subr.bf16.mxu0 0
    %598 = vmatpush1.bf16.msra.mxu0 %v580
    %599 = vmatprep.subr.bf16.mxu0 0
    %600 = vmatpush1.bf16.msra.mxu0 %v581
    %601 = vmatprep.subr.bf16.mxu0 0
    %602 = vmatpush1.bf16.msra.mxu0 %v582
    %603 = vmatprep.subr.bf16.mxu0 0
    %604 = vmatpush1.bf16.msra.mxu0 %v583
    %605 = vmatprep.subr.bf16.mxu0 0
    %606 = vmatpush1.bf16.msra.mxu0 %v584
    %607 = vmatprep.subr.bf16.mxu0 0
    %608 = vmatpush1.bf16.msra.mxu0 %v585
    %609 = vmatprep.subr.bf16.mxu0 0
    %610 = vmatpush1.bf16.msra.mxu0 %v586
    %611 = vmatprep.subr.bf16.mxu0 0
    %612 = vmatpush1.bf16.msra.mxu0 0
    %613 = vmatprep.subr.bf16.mxu0 0
    %614 = vmatpush1.bf16.msra.mxu0 0
    %615 = vmatprep.subr.bf16.mxu0 0
    %616 = vmatpush1.bf16.msra.mxu0 0
    %617 = vmatprep.subr.bf16.mxu0 0
    %618 = vmatpush1.bf16.msra.mxu0 0
    %619 = vmatprep.subr.bf16.mxu0 0
    %620 = vmatpush1.bf16.msra.mxu0 0
    %621 = vmatprep.subr.bf16.mxu0 0
    %622 = vmatpush1.bf16.msra.mxu0 0
    %623 = vmatprep.subr.bf16.mxu0 0
    %624 = vmatpush1.bf16.msra.mxu0 0
    %625 = vmatprep.subr.bf16.mxu0 0
    %626 = vmatpush1.bf16.msra.mxu0 0
    %627 = vmatprep.mubr.bf16.mxu0 0
    %628 = vmatmul.mubr.bf16.gmra.mrb[0].mxu0 %v522
    %v629 = vpop.f32.mrb[0].mxu0
    %v630 = vadd.f32 %v545, %v629
    %v631 = vpop.f32.mrb[0].mxu0
    %v632 = vpop.f32.mrb[0].mxu0
    %v633 = vadd.f32 %v545, %v632
    %v634 = vpop.f32.mrb[0].mxu0
    %635 = vmatprep.mubr.bf16.mxu0 0
    %636 = vmatmul.mubr.bf16.gmra.mrb[0].mxu0 %v523
    %v637 = vpop.f32.mrb[0].mxu0
    %v638 = vadd.f32 %v545, %v637
    %v639 = vpop.f32.mrb[0].mxu0
    %v640 = vpop.f32.mrb[0].mxu0
    %v641 = vadd.f32 %v545, %v640
    %v642 = vpop.f32.mrb[0].mxu0
    %643 = vdwg.mxu0
    %v644 = vmax.f32 %v630, 0.0
    %v645 = vmax.f32 %v633, 0.0
    %v646 = vmax.f32 %v638, 0.0
    %v647 = vmax.f32 %v641, 0.0
    %v648 = vpack.c.bf16 %v645, %v644
    %v649 = vpack.c.bf16 %v647, %v646
    %v650 = vld [vmem:[#allocation11] sm:$0xff]
    %v651 = vld [vmem:[#allocation11 + $0x8] sm:$0xff]
    %v652 = vld [vmem:[#allocation11 + $0x10] sm:$0xff]
    %v653 = vld [vmem:[#allocation11 + $0x18] sm:$0xff]
    %v654 = vld [vmem:[#allocation11 + $0x20] sm:$0xff]
    %v655 = vld [vmem:[#allocation11 + $0x28] sm:$0xff]
    %v656 = vld [vmem:[#allocation11 + $0x30] sm:$0xff]
    %v657 = vld [vmem:[#allocation11 + $0x38] sm:$0xff]
    %v658 = vld [vmem:[#allocation11 + $0x40] sm:$0xff]
    %v659 = vld [vmem:[#allocation11 + $0x48] sm:$0xff]
    %v660 = vld [vmem:[#allocation11 + $0x50] sm:$0xff]
    %v661 = vld [vmem:[#allocation11 + $0x58] sm:$0xff]
    %v662 = vld [vmem:[#allocation11 + $0x60] sm:$0xff]
    %v663 = vld [vmem:[#allocation11 + $0x68] sm:$0xff]
    %v664 = vld [vmem:[#allocation11 + $0x70] sm:$0xff]
    %v665 = vld [vmem:[#allocation11 + $0x78] sm:$0xff]
    %v666 = vld [vmem:[%s9] sm:$0x3]
    %v668 = vlaneseq
    %v669 = vshrl.u32 %v668, 7
    %v670 = vsub.s32 0, %v669
    %v671 = vrot.slane %v666, %v670
    %v672 = vlaneseq
    %v673 = vshrl.u32 %v672, 7
    %v674 = vsub.s32 1, %v673
    %v675 = vrot.slane %v666, %v674
    %v694 = vunpack.c.l.b16 %v650
    %v695 = vunpack.c.h.b16 %v650
    %v696 = vunpack.c.l.b16 %v651
    %v697 = vunpack.c.h.b16 %v651
    %v698 = vunpack.c.l.b16 %v652
    %v699 = vunpack.c.h.b16 %v652
    %v700 = vunpack.c.l.b16 %v653
    %v701 = vunpack.c.h.b16 %v653
    %v702 = vunpack.c.l.b16 %v654
    %v703 = vunpack.c.h.b16 %v654
    %v704 = vunpack.c.l.b16 %v655
    %v705 = vunpack.c.h.b16 %v655
    %v706 = vunpack.c.l.b16 %v656
    %v707 = vunpack.c.h.b16 %v656
    %v708 = vunpack.c.l.b16 %v657
    %v709 = vunpack.c.h.b16 %v657
    %v710 = vunpack.c.l.b16 %v658
    %v711 = vunpack.c.h.b16 %v658
    %v712 = vunpack.c.l.b16 %v659
    %v713 = vunpack.c.h.b16 %v659
    %v714 = vunpack.c.l.b16 %v660
    %v715 = vunpack.c.h.b16 %v660
    %v716 = vunpack.c.l.b16 %v661
    %v717 = vunpack.c.h.b16 %v661
    %v718 = vunpack.c.l.b16 %v662
    %v719 = vunpack.c.h.b16 %v662
    %v720 = vunpack.c.l.b16 %v663
    %v721 = vunpack.c.h.b16 %v663
    %v722 = vunpack.c.l.b16 %v664
    %v723 = vunpack.c.h.b16 %v664
    %v724 = vunpack.c.l.b16 %v665
    %v725 = vunpack.c.h.b16 %v665
    %v726 = vpack.c.b16 %v696, %v694
    %v727 = vpack.c.b16 %v697, %v695
    %v728 = vpack.c.b16 %v700, %v698
    %v729 = vpack.c.b16 %v701, %v699
    %v730 = vpack.c.b16 %v704, %v702
    %v731 = vpack.c.b16 %v705, %v703
    %v732 = vpack.c.b16 %v708, %v706
    %v733 = vpack.c.b16 %v709, %v707
    %v734 = vpack.c.b16 %v712, %v710
    %v735 = vpack.c.b16 %v713, %v711
    %v736 = vpack.c.b16 %v716, %v714
    %v737 = vpack.c.b16 %v717, %v715
    %v738 = vpack.c.b16 %v720, %v718
    %v739 = vpack.c.b16 %v721, %v719
    %v740 = vpack.c.b16 %v724, %v722
    %v741 = vpack.c.b16 %v725, %v723
    %758 = vmatprep.subr.bf16.mxu0 %v727
    %759 = vmatpush1.bf16.msra.mxu0 %v726
    %760 = vmatprep.subr.bf16.mxu0 %v729
    %761 = vmatpush1.bf16.msra.mxu0 %v728
    %762 = vmatprep.subr.bf16.mxu0 %v731
    %763 = vmatpush1.bf16.msra.mxu0 %v730
    %764 = vmatprep.subr.bf16.mxu0 %v733
    %765 = vmatpush1.bf16.msra.mxu0 %v732
    %766 = vmatprep.subr.bf16.mxu0 %v735
    %767 = vmatpush1.bf16.msra.mxu0 %v734
    %768 = vmatprep.subr.bf16.mxu0 %v737
    %769 = vmatpush1.bf16.msra.mxu0 %v736
    %770 = vmatprep.subr.bf16.mxu0 %v739
    %771 = vmatpush1.bf16.msra.mxu0 %v738
    %772 = vmatprep.subr.bf16.mxu0 %v741
    %773 = vmatpush1.bf16.msra.mxu0 %v740
    %774 = vmatprep.subr.bf16.mxu0 0
    %775 = vmatpush1.bf16.msra.mxu0 0
    %776 = vmatprep.subr.bf16.mxu0 0
    %777 = vmatpush1.bf16.msra.mxu0 0
    %778 = vmatprep.subr.bf16.mxu0 0
    %779 = vmatpush1.bf16.msra.mxu0 0
    %780 = vmatprep.subr.bf16.mxu0 0
    %781 = vmatpush1.bf16.msra.mxu0 0
    %782 = vmatprep.subr.bf16.mxu0 0
    %783 = vmatpush1.bf16.msra.mxu0 0
    %784 = vmatprep.subr.bf16.mxu0 0
    %785 = vmatpush1.bf16.msra.mxu0 0
    %786 = vmatprep.subr.bf16.mxu0 0
    %787 = vmatpush1.bf16.msra.mxu0 0
    %788 = vmatprep.subr.bf16.mxu0 0
    %789 = vmatpush1.bf16.msra.mxu0 0
    %790 = vmatprep.mubr.bf16.mxu0 0
    %791 = vmatmul.mubr.bf16.gmra.mrb[0].mxu0 %v648
    %v792 = vpop.f32.mrb[0].mxu0
    %v793 = vadd.f32 %v671, %v792
    %v794 = vpop.f32.mrb[0].mxu0
    %v795 = vadd.f32 %v675, %v794
    %v796 = vpop.f32.mrb[0].mxu0
    %v797 = vadd.f32 %v671, %v796
    %v798 = vpop.f32.mrb[0].mxu0
    %v799 = vadd.f32 %v675, %v798
    %800 = vmatprep.mubr.bf16.mxu0 0
    %801 = vmatmul.mubr.bf16.gmra.mrb[0].mxu0 %v649
    %v802 = vpop.f32.mrb[0].mxu0
    %v803 = vadd.f32 %v671, %v802
    %v804 = vpop.f32.mrb[0].mxu0
    %v805 = vadd.f32 %v675, %v804
    %v806 = vpop.f32.mrb[0].mxu0
    %v807 = vadd.f32 %v671, %v806
    %v808 = vpop.f32.mrb[0].mxu0
    %v809 = vadd.f32 %v675, %v808
    %810 = vdwg.mxu0
    %v811 = vmul.f32 %v123, %v793
    %v812 = vmul.f32 %v124, %v795
    %v813 = vmul.f32 %v125, %v797
    %v814 = vmul.f32 %v126, %v799
    %v815 = vmul.f32 %v127, %v803
    %v816 = vmul.f32 %v128, %v805
    %v817 = vmul.f32 %v129, %v807
    %v818 = vmul.f32 %v130, %v809
    %v819 = vmax.f32 %v793, 0.0
    %v820 = vmax.f32 %v795, 0.0
    %v821 = vmax.f32 %v797, 0.0
    %v822 = vmax.f32 %v799, 0.0
    %v823 = vmax.f32 %v803, 0.0
    %v824 = vmax.f32 %v805, 0.0
    %v825 = vmax.f32 %v807, 0.0
    %v826 = vmax.f32 %v809, 0.0
    %vm827 = vcmp.ne.f32.partialorder %v793, %v793
    %vm828 = vcmp.ne.f32.partialorder %v795, %v795
    %vm829 = vcmp.ne.f32.partialorder %v797, %v797
    %vm830 = vcmp.ne.f32.partialorder %v799, %v799
    %vm831 = vcmp.ne.f32.partialorder %v803, %v803
    %vm832 = vcmp.ne.f32.partialorder %v805, %v805
    %vm833 = vcmp.ne.f32.partialorder %v807, %v807
    %vm834 = vcmp.ne.f32.partialorder %v809, %v809
    %v835 = vadd.f32 %v793, 0.0
    %v836 = vadd.f32 %v795, 0.0
    %v837 = vadd.f32 %v797, 0.0
    %v838 = vadd.f32 %v799, 0.0
    %v839 = vadd.f32 %v803, 0.0
    %v840 = vadd.f32 %v805, 0.0
    %v841 = vadd.f32 %v807, 0.0
    %v842 = vadd.f32 %v809, 0.0
    %v843 = vand.u32 2147483647, %v793
    %v844 = vand.u32 2147483647, %v795
    %v845 = vand.u32 2147483647, %v797
    %v846 = vand.u32 2147483647, %v799
    %v847 = vand.u32 2147483647, %v803
    %v848 = vand.u32 2147483647, %v805
    %v849 = vand.u32 2147483647, %v807
    %v850 = vand.u32 2147483647, %v809
    %v851 = vsub.f32 0.0, %v843
    %v852 = vsub.f32 0.0, %v844
    %v853 = vsub.f32 0.0, %v845
    %v854 = vsub.f32 0.0, %v846
    %v855 = vsub.f32 0.0, %v847
    %v856 = vsub.f32 0.0, %v848
    %v857 = vsub.f32 0.0, %v849
    %v858 = vsub.f32 0.0, %v850
    %v859 = vmul.f32 %v851, 1.442695
    %v860 = vpow.pop %v859
    %v861 = vmul.f32 %v852, 1.442695
    %v862 = vpow.pop %v861
    %v863 = vmul.f32 %v853, 1.442695
    %v864 = vpow.pop %v863
    %v865 = vmul.f32 %v854, 1.442695
    %v866 = vpow.pop %v865
    %v867 = vmul.f32 %v855, 1.442695
    %v868 = vpow.pop %v867
    %v869 = vmul.f32 %v856, 1.442695
    %v870 = vpow.pop %v869
    %v871 = vmul.f32 %v857, 1.442695
    %v872 = vpow.pop %v871
    %v873 = vmul.f32 %v858, 1.442695
    %v874 = vpow.pop %v873
    %v875 = vadd.f32 %v860, 1.0
    %v876 = vlog2.pop %v875
    %v877 = vmul.f32 %v876, 0.6931472
    %v878 = vmul.f32 -0.5, %v860
    %v879 = vadd.f32 %v878, 1.0
    %v880 = vmul.f32 %v879, %v860
    %v881 = vand.u32 2147483647, %v860
    %vm882 = vcmp.lt.f32.partialorder %v881, 0.0004427343
    %v883 = vsel %vm882, %v880, %v877
    %v884 = vadd.f32 %v862, 1.0
    %v885 = vlog2.pop %v884
    %v886 = vmul.f32 %v885, 0.6931472
    %v887 = vmul.f32 -0.5, %v862
    %v888 = vadd.f32 %v887, 1.0
    %v889 = vmul.f32 %v888, %v862
    %v890 = vand.u32 2147483647, %v862
    %vm891 = vcmp.lt.f32.partialorder %v890, 0.0004427343
    %v892 = vsel %vm891, %v889, %v886
    %v893 = vadd.f32 %v864, 1.0
    %v894 = vlog2.pop %v893
    %v895 = vmul.f32 %v894, 0.6931472
    %v896 = vmul.f32 -0.5, %v864
    %v897 = vadd.f32 %v896, 1.0
    %v898 = vmul.f32 %v897, %v864
    %v899 = vand.u32 2147483647, %v864
    %vm900 = vcmp.lt.f32.partialorder %v899, 0.0004427343
    %v901 = vsel %vm900, %v898, %v895
    %v902 = vadd.f32 %v866, 1.0
    %v903 = vlog2.pop %v902
    %v904 = vmul.f32 %v903, 0.6931472
    %v905 = vmul.f32 -0.5, %v866
    %v906 = vadd.f32 %v905, 1.0
    %v907 = vmul.f32 %v906, %v866
    %v908 = vand.u32 2147483647, %v866
    %vm909 = vcmp.lt.f32.partialorder %v908, 0.0004427343
    %v910 = vsel %vm909, %v907, %v904
    %v911 = vadd.f32 %v868, 1.0
    %v912 = vlog2.pop %v911
    %v913 = vmul.f32 %v912, 0.6931472
    %v914 = vmul.f32 -0.5, %v868
    %v915 = vadd.f32 %v914, 1.0
    %v916 = vmul.f32 %v915, %v868
    %v917 = vand.u32 2147483647, %v868
    %vm918 = vcmp.lt.f32.partialorder %v917, 0.0004427343
    %v919 = vsel %vm918, %v916, %v913
    %v920 = vadd.f32 %v870, 1.0
    %v921 = vlog2.pop %v920
    %v922 = vmul.f32 %v921, 0.6931472
    %v923 = vmul.f32 -0.5, %v870
    %v924 = vadd.f32 %v923, 1.0
    %v925 = vmul.f32 %v924, %v870
    %v926 = vand.u32 2147483647, %v870
    %vm927 = vcmp.lt.f32.partialorder %v926, 0.0004427343
    %v928 = vsel %vm927, %v925, %v922
    %v929 = vadd.f32 %v872, 1.0
    %v930 = vlog2.pop %v929
    %v931 = vmul.f32 %v930, 0.6931472
    %v932 = vmul.f32 -0.5, %v872
    %v933 = vadd.f32 %v932, 1.0
    %v934 = vmul.f32 %v933, %v872
    %v935 = vand.u32 2147483647, %v872
    %vm936 = vcmp.lt.f32.partialorder %v935, 0.0004427343
    %v937 = vsel %vm936, %v934, %v931
    %v938 = vadd.f32 %v874, 1.0
    %v939 = vlog2.pop %v938
    %v940 = vmul.f32 %v939, 0.6931472
    %v941 = vmul.f32 -0.5, %v874
    %v942 = vadd.f32 %v941, 1.0
    %v943 = vmul.f32 %v942, %v874
    %v944 = vand.u32 2147483647, %v874
    %vm945 = vcmp.lt.f32.partialorder %v944, 0.0004427343
    %v946 = vsel %vm945, %v943, %v940
    %v947 = vadd.f32 %v819, %v883
    %v948 = vadd.f32 %v820, %v892
    %v949 = vadd.f32 %v821, %v901
    %v950 = vadd.f32 %v822, %v910
    %v951 = vadd.f32 %v823, %v919
    %v952 = vadd.f32 %v824, %v928
    %v953 = vadd.f32 %v825, %v937
    %v954 = vadd.f32 %v826, %v946
    %v955 = vsel %vm827, %v835, %v947
    %v956 = vsel %vm828, %v836, %v948
    %v957 = vsel %vm829, %v837, %v949
    %v958 = vsel %vm830, %v838, %v950
    %v959 = vsel %vm831, %v839, %v951
    %v960 = vsel %vm832, %v840, %v952
    %v961 = vsel %vm833, %v841, %v953
    %v962 = vsel %vm834, %v842, %v954
    %v963 = vsub.f32 %v811, %v955
    %v964 = vsub.f32 %v812, %v956
    %v965 = vsub.f32 %v813, %v957
    %v966 = vsub.f32 %v814, %v958
    %v967 = vsub.f32 %v815, %v959
    %v968 = vsub.f32 %v816, %v960
    %v969 = vsub.f32 %v817, %v961
    %v970 = vsub.f32 %v818, %v962
    %v971 = vadd.f32 %v963, %v964
    %972 = vadd.xlane.f32.xlu0 %v971
    %v973 = vpop.xlane.xlu0 %972
    %v974 = vadd.f32 %v965, %v966
    %975 = vadd.xlane.f32.xlu0 %v974
    %v976 = vpop.xlane.xlu0 %975
    %v977 = vadd.f32 %v967, %v968
    %978 = vadd.xlane.f32.xlu0 %v977
    %v979 = vpop.xlane.xlu0 %978
    %v980 = vadd.f32 %v969, %v970
    %981 = vadd.xlane.f32.xlu0 %v980
    %v982 = vpop.xlane.xlu0 %981
    %v983 = vmul.f32 %v507, %v507
    %v984 = vmul.f32 %v509, %v509
    %v985 = vmul.f32 %v511, %v511
    %v986 = vmul.f32 %v513, %v513
    %v987 = vmul.f32 %v488, %v488
    %v988 = vmul.f32 %v492, %v492
    %v989 = vmul.f32 %v498, %v498
    %v990 = vmul.f32 %v502, %v502
    %v991 = vadd.f32 %v983, %v987
    %v992 = vadd.f32 %v984, %v988
    %v993 = vadd.f32 %v985, %v989
    %v994 = vadd.f32 %v986, %v990
    %v995 = vsub.f32 %v991, 1.0
    %v996 = vsub.f32 %v992, 1.0
    %v997 = vsub.f32 %v993, 1.0
    %v998 = vsub.f32 %v994, 1.0
    %v999 = vmul.f32 %v995, 0.5
    %v1000 = vmul.f32 %v996, 0.5
    %v1001 = vmul.f32 %v997, 0.5
    %v1002 = vmul.f32 %v998, 0.5
    %v1003 = vsub.f32 %v999, %v490
    %v1004 = vsub.f32 %v1000, %v494
    %v1005 = vsub.f32 %v1001, %v500
    %v1006 = vsub.f32 %v1002, %v504
    %1007 = vadd.xlane.f32.xlu0 %v1003
    %v1008 = vpop.xlane.xlu0 %1007
    %1009 = vadd.xlane.f32.xlu0 %v1004
    %v1010 = vpop.xlane.xlu0 %1009
    %1011 = vadd.xlane.f32.xlu0 %v1005
    %v1012 = vpop.xlane.xlu0 %1011
    %1013 = vadd.xlane.f32.xlu0 %v1006
    %v1014 = vpop.xlane.xlu0 %1013
    %v1015 = vsub.f32 %v973, %v1008
    %v1016 = vsub.f32 %v976, %v1010
    %v1017 = vsub.f32 %v979, %v1012
    %v1018 = vsub.f32 %v982, %v1014
    %vm1019 = vcmask 7168
    %v1020 = vsel %vm1019, %v1015, 0.0
    %v1021 = vsel %vm1019, %v1016, 0.0
    %v1022 = vadd.f32 %v1020, %v1021
    %v1023 = vsel %vm1019, %v1017, 0.0
    %v1024 = vadd.f32 %v1022, %v1023
    %v1025 = vsel %vm1019, %v1018, 0.0
    %v1026 = vadd.f32 %v1024, %v1025
    %1027 = vadd.xlane.f32.xlu0 %v1026
    %v1028 = vpop.xlane.xlu0 %1027
    %v1029 = vrot.slane %v1028, 4
    %v1030 = vadd.f32 %v1028, %v1029
    %v1031 = vrot.slane %v1030, 2
    %v1032 = vadd.f32 %v1030, %v1031
    %v1033 = vrot.slane %v1032, 1
    %v1034 = vadd.f32 %v1032, %v1033
    %s1035 = vtos %v1034
    %v1036 = vstv %s1035
    %1037 = vst [vmem:[#allocation13] sm:$0xff] %v1036
    // Predicated region
    $region66: #{tpu_custom_call.1} parent=1 // pred_check
      _
    $region67: #{tpu_custom_call.1} parent=1 // pred_check_branch
      %1039 = sbr.rel (0) target = $region69
    $region68: #{tpu_custom_call.1} parent=1 // pred_region
      %s1041 = ssub.s32 128, 128
      %1042 = vsyncadd [#allocation4], %s1041
      %s1044 = sshll.u32 [#allocation13], 4
      %s1045 = int_to_ptr.vmem [resolvable:$true] %s1044
      %1047 = dma.vmem_to_hbm [thread:$0]  %s1045, 128, %s10, [#allocation4]
    $region69: #{tpu_custom_call.1} parent=1 // pred_fallthru
      _
    // Predicated region
    $region70: #{tpu_custom_call.1} parent=1 // pred_check
      _
    $region71: #{tpu_custom_call.1} parent=1 // pred_check_branch
      %1049 = sbr.rel (0) target = $region73
    $region72: #{tpu_custom_call.1} parent=1 // pred_region
      %1050 = dma.done [#allocation4], 128
    $region73: #{tpu_custom_call.1} parent=1 // pred_fallthru
      _
    %1051 = vsyncpa [#allocation3], 1
    %1052 = vsyncpa [#allocation6], 1
    %1053 = vsyncpa [#allocation9], 1
    %1054 = vsyncpa [#allocation12], 1
    %1055 = vsyncpa [#allocation4], 1

</llo_original>
